<compile_context>
chip_gen: v6e
topology: v6e:2x2x1
jax: 0.10.0
libtpu: 0.0.40
codegen_flags: <defaults>
</compile_context>

<pallas_src>
import functools

import jax
import jax.numpy as jnp
from jax import lax
from jax.experimental import pallas as pl
from jax.experimental.pallas import tpu as pltpu

EPS = 1e-5


def _fold_bn(gamma, beta, mean, var):
    scale = (gamma / jnp.sqrt(var + EPS)).astype(jnp.float32)
    shift = (beta - mean * scale).astype(jnp.float32)
    return scale, shift


# ----------------------------------------------------------------------------
# Fused kernel: one grid step == one image (all intermediates VMEM-resident)
# ----------------------------------------------------------------------------
def _bottleneck_kernel(H, W, x_ref, w1_ref, w2_ref, w3_ref,
                       s1_ref, b1_ref, s2_ref, b2_ref, s3_ref, b3_ref,
                       o_ref, pad_ref):
    HW = H * W
    planes = w1_ref.shape[0]

    x = x_ref[0]                                               # (Cin, HW), f32

    # ---- stage 1: 1x1 conv (channels-first matmul) + BN + ReLU -------------
    y1 = jnp.dot(w1_ref[...], x, preferred_element_type=jnp.float32)
    y1 = jnp.maximum(y1 * s1_ref[...] + b1_ref[...], 0.0)      # (planes, HW)

    # ---- stage 2: 3x3 conv (padding=1) + BN + ReLU --------------------------
    # Channels-last view so the 9 taps are cheap sublane/leading-dim slices of
    # a zero-haloed VMEM scratch (no host-side pad, no HBM traffic).
    y1_cl = y1.T.reshape(H, W, planes)                         # (H, W, planes)
    pad_ref[...] = jnp.zeros_like(pad_ref)
    pad_ref[1:H + 1, 1:W + 1, :] = y1_cl

    acc = jnp.zeros((HW, planes), jnp.float32)
    for kh in range(3):
        for kw in range(3):
            xs = pad_ref[kh:kh + H, kw:kw + W, :].reshape(HW, planes)
            acc += jnp.dot(xs, w2_ref[kh * 3 + kw],
                           preferred_element_type=jnp.float32)
    y2 = jnp.maximum(acc * s2_ref[...] + b2_ref[...], 0.0)     # (HW, planes)

    # ---- stage 3: 1x1 conv + BN + residual (VMEM-resident x) + ReLU --------
    y3 = jnp.dot(w3_ref[...], y2.T, preferred_element_type=jnp.float32)
    y3 = y3 * s3_ref[...] + b3_ref[...] + x                    # (Cout, HW)
    o_ref[0] = jnp.maximum(y3, 0.0).astype(o_ref.dtype)


# ----------------------------------------------------------------------------
# Wrapper
# ----------------------------------------------------------------------------
def bottleneck_forward(x_nchw, p):
    """Pallas implementation of Botlleneck.forward (stride=1, downsample=None).

    Weights use PyTorch OIHW layout; x is NCHW.
    """
    N, Cin, H, W = x_nchw.shape
    planes = p["w1"].shape[0]
    Cout = p["w3"].shape[0]
    assert Cout == Cin, "identity residual requires inplanes == planes * expansion"
    HW = H * W

    x3 = x_nchw.reshape(N, Cin, HW)                            # free view of NCHW

    w1 = p["w1"].reshape(planes, Cin)                          # (P, Cin)
    # OIHW -> tap-major (9, Cin, Cout): w2t[kh*3+kw, q, p] = w2[p, q, kh, kw]
    w2 = jnp.transpose(p["w2"], (2, 3, 1, 0)).reshape(9, planes, planes)
    w3 = p["w3"].reshape(Cout, planes)                         # (Cout, P)

    s1, b1 = _fold_bn(p["g1"], p["b1"], p["m1"], p["v1"])
    s2, b2 = _fold_bn(p["g2"], p["b2"], p["m2"], p["v2"])
    s3, b3 = _fold_bn(p["g3"], p["b3"], p["m3"], p["v3"])
    s1, b1 = s1.reshape(planes, 1), b1.reshape(planes, 1)      # channels-first bcast
    s2, b2 = s2.reshape(1, planes), b2.reshape(1, planes)      # channels-last bcast
    s3, b3 = s3.reshape(Cout, 1), b3.reshape(Cout, 1)          # channels-first bcast

    def full(shape):
        return pl.BlockSpec(shape, lambda n: (0,) * len(shape))

    kernel = functools.partial(_bottleneck_kernel, H, W)
    out = pl.pallas_call(
        kernel,
        out_shape=jax.ShapeDtypeStruct((N, Cout, HW), jnp.float32),
        grid=(N,),
        in_specs=[
            pl.BlockSpec((1, Cin, HW), lambda n: (n, 0, 0)),
            full((planes, Cin)),
            full((9, planes, planes)),
            full((Cout, planes)),
            full((planes, 1)), full((planes, 1)),
            full((1, planes)), full((1, planes)),
            full((Cout, 1)), full((Cout, 1)),
        ],
        out_specs=pl.BlockSpec((1, Cout, HW), lambda n: (n, 0, 0)),
        scratch_shapes=[pltpu.VMEM((H + 2, W + 2, planes), jnp.float32)],
        compiler_params=pltpu.CompilerParams(
            dimension_semantics=("parallel",)),
    )(x3, w1, w2, w3, s1, b1, s2, b2, s3, b3)
    return out.reshape(N, Cout, H, W)


# ----------------------------------------------------------------------------
# Pure-JAX reference (for correctness check)
# ----------------------------------------------------------------------------
def bottleneck_reference(x_nchw, p):
    dn = ("NCHW", "OIHW", "NCHW")

    def bn(y, g, b, m, v):
        g, b, m, v = (t.reshape(1, -1, 1, 1) for t in (g, b, m, v))
        return (y - m) / jnp.sqrt(v + EPS) * g + b

    y = lax.conv_general_dilated(x_nchw, p["w1"], (1, 1), "SAME",
                                 dimension_numbers=dn)
    y = jax.nn.relu(bn(y, p["g1"], p["b1"], p["m1"], p["v1"]))
    y = lax.conv_general_dilated(y, p["w2"], (1, 1), "SAME",
                                 dimension_numbers=dn)
    y = jax.nn.relu(bn(y, p["g2"], p["b2"], p["m2"], p["v2"]))
    y = lax.conv_general_dilated(y, p["w3"], (1, 1), "SAME",
                                 dimension_numbers=dn)
    y = bn(y, p["g3"], p["b3"], p["m3"], p["v3"]) + x_nchw
    return jax.nn.relu(y)


# ----------------------------------------------------------------------------
if __name__ == "__main__":
    planes = 8
    expansion = 4
    inplanes = planes * expansion      # 32: identity add valid (downsample=None)
    N, H, W = 2, 8, 8

    key = jax.random.PRNGKey(0)
    ks = jax.random.split(key, 16)

    def bn_params(kg, kb, km, kv, c):
        return (0.5 + jax.random.uniform(kg, (c,), jnp.float32),       # gamma
                0.1 * jax.random.normal(kb, (c,), jnp.float32),        # beta
                0.1 * jax.random.normal(km, (c,), jnp.float32),        # running_mean
                0.5 + jax.random.uniform(kv, (c,), jnp.float32))       # running_var > 0

    g1, b1, m1, v1 = bn_params(ks[0], ks[1], ks[2], ks[3], planes)
    g2, b2, m2, v2 = bn_params(ks[4], ks[5], ks[6], ks[7], planes)
    g3, b3, m3, v3 = bn_params(ks[8], ks[9], ks[10], ks[11], planes * expansion)

    params = dict(
        # PyTorch OIHW conv weights (bias=False):
        w1=0.1 * jax.random.normal(ks[12], (planes, inplanes, 1, 1), jnp.float32),
        w2=0.1 * jax.random.normal(ks[13], (planes, planes, 3, 3), jnp.float32),
        w3=0.1 * jax.random.normal(ks[14], (planes * expansion, planes, 1, 1),
                                   jnp.float32),
        g1=g1, b1=b1, m1=m1, v1=v1,
        g2=g2, b2=b2, m2=m2, v2=v2,
        g3=g3, b3=b3, m3=m3, v3=v3,
    )

    x = jax.random.normal(ks[15], (N, inplanes, H, W), jnp.float32)    # NCHW

    out = jax.block_until_ready(bottleneck_forward(x, params))
    ref = jax.block_until_ready(bottleneck_reference(x, params))

    assert out.shape == (N, inplanes, H, W), out.shape
    err = float(jnp.max(jnp.abs(out - ref)))
    assert err < 1e-3, err
    print("KERNEL_OK")
</pallas_src>

<mosaic_0001>
module attributes {stable_mosaic.version = 11 : i64} {
  func.func @_bottleneck_kernel(%arg0: i32, %arg1: memref<1x32x64xf32, #tpu.memory_space<vmem>>, %arg2: memref<8x32xf32, #tpu.memory_space<vmem>>, %arg3: memref<9x8x8xf32, #tpu.memory_space<vmem>>, %arg4: memref<32x8xf32, #tpu.memory_space<vmem>>, %arg5: memref<8x1xf32, #tpu.memory_space<vmem>>, %arg6: memref<8x1xf32, #tpu.memory_space<vmem>>, %arg7: memref<1x8xf32, #tpu.memory_space<vmem>>, %arg8: memref<1x8xf32, #tpu.memory_space<vmem>>, %arg9: memref<32x1xf32, #tpu.memory_space<vmem>>, %arg10: memref<32x1xf32, #tpu.memory_space<vmem>>, %arg11: memref<1x32x64xf32, #tpu.memory_space<vmem>>, %arg12: memref<10x10x8xf32, #tpu.memory_space<vmem>>) attributes {dimension_semantics = [#tpu.dimension_semantics<parallel>], iteration_bounds = array<i64: 2>, scalar_prefetch = 0 : i64, scratch_operands = 1 : i64, tpu.core_type = #tpu.core_type<tc>, window_params = [{transform_indices = @transform_0, window_bounds = array<i64: 1, 32, 64>}, {pipeline_mode = #tpu.pipeline_mode<synchronous>, transform_indices = @transform_1, window_bounds = array<i64: 8, 32>}, {pipeline_mode = #tpu.pipeline_mode<synchronous>, transform_indices = @transform_2, window_bounds = array<i64: 9, 8, 8>}, {pipeline_mode = #tpu.pipeline_mode<synchronous>, transform_indices = @transform_3, window_bounds = array<i64: 32, 8>}, {pipeline_mode = #tpu.pipeline_mode<synchronous>, transform_indices = @transform_4, window_bounds = array<i64: 8, 1>}, {pipeline_mode = #tpu.pipeline_mode<synchronous>, transform_indices = @transform_5, window_bounds = array<i64: 8, 1>}, {pipeline_mode = #tpu.pipeline_mode<synchronous>, transform_indices = @transform_6, window_bounds = array<i64: 1, 8>}, {pipeline_mode = #tpu.pipeline_mode<synchronous>, transform_indices = @transform_7, window_bounds = array<i64: 1, 8>}, {pipeline_mode = #tpu.pipeline_mode<synchronous>, transform_indices = @transform_8, window_bounds = array<i64: 32, 1>}, {pipeline_mode = #tpu.pipeline_mode<synchronous>, transform_indices = @transform_9, window_bounds = array<i64: 32, 1>}, {transform_indices = @transform_10, window_bounds = array<i64: 1, 32, 64>}]} {
    %c0 = arith.constant 0 : index
    %c0_0 = arith.constant 0 : index
    %c0_1 = arith.constant 0 : index
    %0 = vector.load %arg1[%c0, %c0_0, %c0_1] : memref<1x32x64xf32, #tpu.memory_space<vmem>>, vector<1x32x64xf32>
    %1 = vector.shape_cast %0 : vector<1x32x64xf32> to vector<32x64xf32>
    %c0_2 = arith.constant 0 : index
    %c0_3 = arith.constant 0 : index
    %2 = vector.load %arg2[%c0_2, %c0_3] : memref<8x32xf32, #tpu.memory_space<vmem>>, vector<8x32xf32>
    %cst = arith.constant dense<0.000000e+00> : vector<8x64xf32>
    %3 = tpu.matmul %2, %1, %cst {dimension_numbers = #tpu.dot_dimension_numbers<[1], [0], [0], [1], [0, 0, 1, 1], [], []>} : vector<8x32xf32>, vector<32x64xf32>, vector<8x64xf32> -> vector<8x64xf32>
    %c0_4 = arith.constant 0 : index
    %c0_5 = arith.constant 0 : index
    %4 = vector.load %arg5[%c0_4, %c0_5] : memref<8x1xf32, #tpu.memory_space<vmem>>, vector<8x1xf32>
    %5 = vector.broadcast %4 : vector<8x1xf32> to vector<8x64xf32>
    %6 = arith.mulf %3, %5 : vector<8x64xf32>
    %c0_6 = arith.constant 0 : index
    %c0_7 = arith.constant 0 : index
    %7 = vector.load %arg6[%c0_6, %c0_7] : memref<8x1xf32, #tpu.memory_space<vmem>>, vector<8x1xf32>
    %8 = vector.broadcast %7 : vector<8x1xf32> to vector<8x64xf32>
    %9 = arith.addf %6, %8 : vector<8x64xf32>
    %cst_8 = arith.constant 0.000000e+00 : f32
    %10 = vector.broadcast %cst_8 : f32 to vector<8x64xf32>
    %11 = arith.maximumf %9, %10 : vector<8x64xf32>
    %12 = tpu.transpose %11, [1, 0] : vector<8x64xf32> -> vector<64x8xf32>
    %13 = vector.shape_cast %12 : vector<64x8xf32> to vector<8x8x8xf32>
    %cst_9 = arith.constant 0.000000e+00 : f32
    %14 = vector.broadcast %cst_9 : f32 to vector<10x10x8xf32>
    %c0_10 = arith.constant 0 : index
    %c0_11 = arith.constant 0 : index
    %c0_12 = arith.constant 0 : index
    %15 = vector.load %arg12[%c0_10, %c0_11, %c0_12] : memref<10x10x8xf32, #tpu.memory_space<vmem>>, vector<10x10x8xf32>
    tpu.vector_store %arg12[%c0_10, %c0_11, %c0_12], %14 {strides = array<i32>} : memref<10x10x8xf32, #tpu.memory_space<vmem>>, vector<10x10x8xf32>,
    %c1 = arith.constant 1 : index
    %c1_13 = arith.constant 1 : index
    %c0_14 = arith.constant 0 : index
    %16 = vector.load %arg12[%c1, %c1_13, %c0_14] : memref<10x10x8xf32, #tpu.memory_space<vmem>>, vector<8x8x8xf32>
    tpu.vector_store %arg12[%c1, %c1_13, %c0_14], %13 {strides = array<i32>} : memref<10x10x8xf32, #tpu.memory_space<vmem>>, vector<8x8x8xf32>,
    %cst_15 = arith.constant 0.000000e+00 : f32
    %17 = vector.broadcast %cst_15 : f32 to vector<64x8xf32>
    %c0_16 = arith.constant 0 : index
    %c0_17 = arith.constant 0 : index
    %c0_18 = arith.constant 0 : index
    %18 = vector.load %arg12[%c0_16, %c0_17, %c0_18] : memref<10x10x8xf32, #tpu.memory_space<vmem>>, vector<8x8x8xf32>
    %19 = vector.shape_cast %18 : vector<8x8x8xf32> to vector<64x8xf32>
    %c0_19 = arith.constant 0 : index
    %c0_20 = arith.constant 0 : index
    %c0_21 = arith.constant 0 : index
    %20 = vector.load %arg3[%c0_19, %c0_20, %c0_21] : memref<9x8x8xf32, #tpu.memory_space<vmem>>, vector<1x8x8xf32>
    %21 = vector.shape_cast %20 : vector<1x8x8xf32> to vector<8x8xf32>
    %cst_22 = arith.constant dense<0.000000e+00> : vector<64x8xf32>
    %22 = tpu.matmul %19, %21, %cst_22 {dimension_numbers = #tpu.dot_dimension_numbers<[1], [0], [0], [1], [0, 0, 1, 1], [], []>} : vector<64x8xf32>, vector<8x8xf32>, vector<64x8xf32> -> vector<64x8xf32>
    %23 = arith.addf %17, %22 : vector<64x8xf32>
    %c0_23 = arith.constant 0 : index
    %c1_24 = arith.constant 1 : index
    %c0_25 = arith.constant 0 : index
    %24 = vector.load %arg12[%c0_23, %c1_24, %c0_25] : memref<10x10x8xf32, #tpu.memory_space<vmem>>, vector<8x8x8xf32>
    %25 = vector.shape_cast %24 : vector<8x8x8xf32> to vector<64x8xf32>
    %c1_26 = arith.constant 1 : index
    %c0_27 = arith.constant 0 : index
    %c0_28 = arith.constant 0 : index
    %26 = vector.load %arg3[%c1_26, %c0_27, %c0_28] : memref<9x8x8xf32, #tpu.memory_space<vmem>>, vector<1x8x8xf32>
    %27 = vector.shape_cast %26 : vector<1x8x8xf32> to vector<8x8xf32>
    %cst_29 = arith.constant dense<0.000000e+00> : vector<64x8xf32>
    %28 = tpu.matmul %25, %27, %cst_29 {dimension_numbers = #tpu.dot_dimension_numbers<[1], [0], [0], [1], [0, 0, 1, 1], [], []>} : vector<64x8xf32>, vector<8x8xf32>, vector<64x8xf32> -> vector<64x8xf32>
    %29 = arith.addf %23, %28 : vector<64x8xf32>
    %c0_30 = arith.constant 0 : index
    %c2 = arith.constant 2 : index
    %c0_31 = arith.constant 0 : index
    %30 = vector.load %arg12[%c0_30, %c2, %c0_31] : memref<10x10x8xf32, #tpu.memory_space<vmem>>, vector<8x8x8xf32>
    %31 = vector.shape_cast %30 : vector<8x8x8xf32> to vector<64x8xf32>
    %c2_32 = arith.constant 2 : index
    %c0_33 = arith.constant 0 : index
    %c0_34 = arith.constant 0 : index
    %32 = vector.load %arg3[%c2_32, %c0_33, %c0_34] : memref<9x8x8xf32, #tpu.memory_space<vmem>>, vector<1x8x8xf32>
    %33 = vector.shape_cast %32 : vector<1x8x8xf32> to vector<8x8xf32>
    %cst_35 = arith.constant dense<0.000000e+00> : vector<64x8xf32>
    %34 = tpu.matmul %31, %33, %cst_35 {dimension_numbers = #tpu.dot_dimension_numbers<[1], [0], [0], [1], [0, 0, 1, 1], [], []>} : vector<64x8xf32>, vector<8x8xf32>, vector<64x8xf32> -> vector<64x8xf32>
    %35 = arith.addf %29, %34 : vector<64x8xf32>
    %c1_36 = arith.constant 1 : index
    %c0_37 = arith.constant 0 : index
    %c0_38 = arith.constant 0 : index
    %36 = vector.load %arg12[%c1_36, %c0_37, %c0_38] : memref<10x10x8xf32, #tpu.memory_space<vmem>>, vector<8x8x8xf32>
    %37 = vector.shape_cast %36 : vector<8x8x8xf32> to vector<64x8xf32>
    %c3 = arith.constant 3 : index
    %c0_39 = arith.constant 0 : index
    %c0_40 = arith.constant 0 : index
    %38 = vector.load %arg3[%c3, %c0_39, %c0_40] : memref<9x8x8xf32, #tpu.memory_space<vmem>>, vector<1x8x8xf32>
    %39 = vector.shape_cast %38 : vector<1x8x8xf32> to vector<8x8xf32>
    %cst_41 = arith.constant dense<0.000000e+00> : vector<64x8xf32>
    %40 = tpu.matmul %37, %39, %cst_41 {dimension_numbers = #tpu.dot_dimension_numbers<[1], [0], [0], [1], [0, 0, 1, 1], [], []>} : vector<64x8xf32>, vector<8x8xf32>, vector<64x8xf32> -> vector<64x8xf32>
    %41 = arith.addf %35, %40 : vector<64x8xf32>
    %c1_42 = arith.constant 1 : index
    %c1_43 = arith.constant 1 : index
    %c0_44 = arith.constant 0 : index
    %42 = vector.load %arg12[%c1_42, %c1_43, %c0_44] : memref<10x10x8xf32, #tpu.memory_space<vmem>>, vector<8x8x8xf32>
    %43 = vector.shape_cast %42 : vector<8x8x8xf32> to vector<64x8xf32>
    %c4 = arith.constant 4 : index
    %c0_45 = arith.constant 0 : index
    %c0_46 = arith.constant 0 : index
    %44 = vector.load %arg3[%c4, %c0_45, %c0_46] : memref<9x8x8xf32, #tpu.memory_space<vmem>>, vector<1x8x8xf32>
    %45 = vector.shape_cast %44 : vector<1x8x8xf32> to vector<8x8xf32>
    %cst_47 = arith.constant dense<0.000000e+00> : vector<64x8xf32>
    %46 = tpu.matmul %43, %45, %cst_47 {dimension_numbers = #tpu.dot_dimension_numbers<[1], [0], [0], [1], [0, 0, 1, 1], [], []>} : vector<64x8xf32>, vector<8x8xf32>, vector<64x8xf32> -> vector<64x8xf32>
    %47 = arith.addf %41, %46 : vector<64x8xf32>
    %c1_48 = arith.constant 1 : index
    %c2_49 = arith.constant 2 : index
    %c0_50 = arith.constant 0 : index
    %48 = vector.load %arg12[%c1_48, %c2_49, %c0_50] : memref<10x10x8xf32, #tpu.memory_space<vmem>>, vector<8x8x8xf32>
    %49 = vector.shape_cast %48 : vector<8x8x8xf32> to vector<64x8xf32>
    %c5 = arith.constant 5 : index
    %c0_51 = arith.constant 0 : index
    %c0_52 = arith.constant 0 : index
    %50 = vector.load %arg3[%c5, %c0_51, %c0_52] : memref<9x8x8xf32, #tpu.memory_space<vmem>>, vector<1x8x8xf32>
    %51 = vector.shape_cast %50 : vector<1x8x8xf32> to vector<8x8xf32>
    %cst_53 = arith.constant dense<0.000000e+00> : vector<64x8xf32>
    %52 = tpu.matmul %49, %51, %cst_53 {dimension_numbers = #tpu.dot_dimension_numbers<[1], [0], [0], [1], [0, 0, 1, 1], [], []>} : vector<64x8xf32>, vector<8x8xf32>, vector<64x8xf32> -> vector<64x8xf32>
    %53 = arith.addf %47, %52 : vector<64x8xf32>
    %c2_54 = arith.constant 2 : index
    %c0_55 = arith.constant 0 : index
    %c0_56 = arith.constant 0 : index
    %54 = vector.load %arg12[%c2_54, %c0_55, %c0_56] : memref<10x10x8xf32, #tpu.memory_space<vmem>>, vector<8x8x8xf32>
    %55 = vector.shape_cast %54 : vector<8x8x8xf32> to vector<64x8xf32>
    %c6 = arith.constant 6 : index
    %c0_57 = arith.constant 0 : index
    %c0_58 = arith.constant 0 : index
    %56 = vector.load %arg3[%c6, %c0_57, %c0_58] : memref<9x8x8xf32, #tpu.memory_space<vmem>>, vector<1x8x8xf32>
    %57 = vector.shape_cast %56 : vector<1x8x8xf32> to vector<8x8xf32>
    %cst_59 = arith.constant dense<0.000000e+00> : vector<64x8xf32>
    %58 = tpu.matmul %55, %57, %cst_59 {dimension_numbers = #tpu.dot_dimension_numbers<[1], [0], [0], [1], [0, 0, 1, 1], [], []>} : vector<64x8xf32>, vector<8x8xf32>, vector<64x8xf32> -> vector<64x8xf32>
    %59 = arith.addf %53, %58 : vector<64x8xf32>
    %c2_60 = arith.constant 2 : index
    %c1_61 = arith.constant 1 : index
    %c0_62 = arith.constant 0 : index
    %60 = vector.load %arg12[%c2_60, %c1_61, %c0_62] : memref<10x10x8xf32, #tpu.memory_space<vmem>>, vector<8x8x8xf32>
    %61 = vector.shape_cast %60 : vector<8x8x8xf32> to vector<64x8xf32>
    %c7 = arith.constant 7 : index
    %c0_63 = arith.constant 0 : index
    %c0_64 = arith.constant 0 : index
    %62 = vector.load %arg3[%c7, %c0_63, %c0_64] : memref<9x8x8xf32, #tpu.memory_space<vmem>>, vector<1x8x8xf32>
    %63 = vector.shape_cast %62 : vector<1x8x8xf32> to vector<8x8xf32>
    %cst_65 = arith.constant dense<0.000000e+00> : vector<64x8xf32>
    %64 = tpu.matmul %61, %63, %cst_65 {dimension_numbers = #tpu.dot_dimension_numbers<[1], [0], [0], [1], [0, 0, 1, 1], [], []>} : vector<64x8xf32>, vector<8x8xf32>, vector<64x8xf32> -> vector<64x8xf32>
    %65 = arith.addf %59, %64 : vector<64x8xf32>
    %c2_66 = arith.constant 2 : index
    %c2_67 = arith.constant 2 : index
    %c0_68 = arith.constant 0 : index
    %66 = vector.load %arg12[%c2_66, %c2_67, %c0_68] : memref<10x10x8xf32, #tpu.memory_space<vmem>>, vector<8x8x8xf32>
    %67 = vector.shape_cast %66 : vector<8x8x8xf32> to vector<64x8xf32>
    %c8 = arith.constant 8 : index
    %c0_69 = arith.constant 0 : index
    %c0_70 = arith.constant 0 : index
    %68 = vector.load %arg3[%c8, %c0_69, %c0_70] : memref<9x8x8xf32, #tpu.memory_space<vmem>>, vector<1x8x8xf32>
    %69 = vector.shape_cast %68 : vector<1x8x8xf32> to vector<8x8xf32>
    %cst_71 = arith.constant dense<0.000000e+00> : vector<64x8xf32>
    %70 = tpu.matmul %67, %69, %cst_71 {dimension_numbers = #tpu.dot_dimension_numbers<[1], [0], [0], [1], [0, 0, 1, 1], [], []>} : vector<64x8xf32>, vector<8x8xf32>, vector<64x8xf32> -> vector<64x8xf32>
    %71 = arith.addf %65, %70 : vector<64x8xf32>
    %c0_72 = arith.constant 0 : index
    %c0_73 = arith.constant 0 : index
    %72 = vector.load %arg7[%c0_72, %c0_73] : memref<1x8xf32, #tpu.memory_space<vmem>>, vector<1x8xf32>
    %73 = vector.broadcast %72 : vector<1x8xf32> to vector<64x8xf32>
    %74 = arith.mulf %71, %73 : vector<64x8xf32>
    %c0_74 = arith.constant 0 : index
    %c0_75 = arith.constant 0 : index
    %75 = vector.load %arg8[%c0_74, %c0_75] : memref<1x8xf32, #tpu.memory_space<vmem>>, vector<1x8xf32>
    %76 = vector.broadcast %75 : vector<1x8xf32> to vector<64x8xf32>
    %77 = arith.addf %74, %76 : vector<64x8xf32>
    %cst_76 = arith.constant 0.000000e+00 : f32
    %78 = vector.broadcast %cst_76 : f32 to vector<64x8xf32>
    %79 = arith.maximumf %77, %78 : vector<64x8xf32>
    %c0_77 = arith.constant 0 : index
    %c0_78 = arith.constant 0 : index
    %80 = vector.load %arg4[%c0_77, %c0_78] : memref<32x8xf32, #tpu.memory_space<vmem>>, vector<32x8xf32>
    %81 = tpu.transpose %79, [1, 0] : vector<64x8xf32> -> vector<8x64xf32>
    %cst_79 = arith.constant dense<0.000000e+00> : vector<32x64xf32>
    %82 = tpu.matmul %80, %81, %cst_79 {dimension_numbers = #tpu.dot_dimension_numbers<[1], [0], [0], [1], [0, 0, 1, 1], [], []>} : vector<32x8xf32>, vector<8x64xf32>, vector<32x64xf32> -> vector<32x64xf32>
    %c0_80 = arith.constant 0 : index
    %c0_81 = arith.constant 0 : index
    %83 = vector.load %arg9[%c0_80, %c0_81] : memref<32x1xf32, #tpu.memory_space<vmem>>, vector<32x1xf32>
    %84 = vector.broadcast %83 : vector<32x1xf32> to vector<32x64xf32>
    %85 = arith.mulf %82, %84 : vector<32x64xf32>
    %c0_82 = arith.constant 0 : index
    %c0_83 = arith.constant 0 : index
    %86 = vector.load %arg10[%c0_82, %c0_83] : memref<32x1xf32, #tpu.memory_space<vmem>>, vector<32x1xf32>
    %87 = vector.broadcast %86 : vector<32x1xf32> to vector<32x64xf32>
    %88 = arith.addf %85, %87 : vector<32x64xf32>
    %89 = arith.addf %88, %1 : vector<32x64xf32>
    %cst_84 = arith.constant 0.000000e+00 : f32
    %90 = vector.broadcast %cst_84 : f32 to vector<32x64xf32>
    %91 = arith.maximumf %89, %90 : vector<32x64xf32>
    %c0_85 = arith.constant 0 : index
    %c0_86 = arith.constant 0 : index
    %c0_87 = arith.constant 0 : index
    %92 = vector.load %arg11[%c0_85, %c0_86, %c0_87] : memref<1x32x64xf32, #tpu.memory_space<vmem>>, vector<1x32x64xf32>
    %93 = vector.shape_cast %92 : vector<1x32x64xf32> to vector<32x64xf32>
    %94 = vector.shape_cast %91 : vector<32x64xf32> to vector<1x32x64xf32>
    tpu.vector_store %arg11[%c0_85, %c0_86, %c0_87], %94 {strides = array<i32>} : memref<1x32x64xf32, #tpu.memory_space<vmem>>, vector<1x32x64xf32>,
    return
  }
  func.func @transform_0(%arg0: i32) -> (i32, i32, i32) {
    %c0_i32 = arith.constant 0 : i32
    %c0_i32_0 = arith.constant 0 : i32
    %c0_i32_1 = arith.constant 0 : i32
    return %arg0, %c0_i32, %c0_i32_0 : i32, i32, i32
  }
  func.func @transform_1(%arg0: i32) -> (i32, i32) {
    %c0_i32 = arith.constant 0 : i32
    %c0_i32_0 = arith.constant 0 : i32
    %c0_i32_1 = arith.constant 0 : i32
    return %c0_i32, %c0_i32_0 : i32, i32
  }
  func.func @transform_2(%arg0: i32) -> (i32, i32, i32) {
    %c0_i32 = arith.constant 0 : i32
    %c0_i32_0 = arith.constant 0 : i32
    %c0_i32_1 = arith.constant 0 : i32
    %c0_i32_2 = arith.constant 0 : i32
    return %c0_i32, %c0_i32_0, %c0_i32_1 : i32, i32, i32
  }
  func.func @transform_3(%arg0: i32) -> (i32, i32) {
    %c0_i32 = arith.constant 0 : i32
    %c0_i32_0 = arith.constant 0 : i32
    %c0_i32_1 = arith.constant 0 : i32
    return %c0_i32, %c0_i32_0 : i32, i32
  }
  func.func @transform_4(%arg0: i32) -> (i32, i32) {
    %c0_i32 = arith.constant 0 : i32
    %c0_i32_0 = arith.constant 0 : i32
    %c0_i32_1 = arith.constant 0 : i32
    return %c0_i32, %c0_i32_0 : i32, i32
  }
  func.func @transform_5(%arg0: i32) -> (i32, i32) {
    %c0_i32 = arith.constant 0 : i32
    %c0_i32_0 = arith.constant 0 : i32
    %c0_i32_1 = arith.constant 0 : i32
    return %c0_i32, %c0_i32_0 : i32, i32
  }
  func.func @transform_6(%arg0: i32) -> (i32, i32) {
    %c0_i32 = arith.constant 0 : i32
    %c0_i32_0 = arith.constant 0 : i32
    %c0_i32_1 = arith.constant 0 : i32
    return %c0_i32, %c0_i32_0 : i32, i32
  }
  func.func @transform_7(%arg0: i32) -> (i32, i32) {
    %c0_i32 = arith.constant 0 : i32
    %c0_i32_0 = arith.constant 0 : i32
    %c0_i32_1 = arith.constant 0 : i32
    return %c0_i32, %c0_i32_0 : i32, i32
  }
  func.func @transform_8(%arg0: i32) -> (i32, i32) {
    %c0_i32 = arith.constant 0 : i32
    %c0_i32_0 = arith.constant 0 : i32
    %c0_i32_1 = arith.constant 0 : i32
    return %c0_i32, %c0_i32_0 : i32, i32
  }
  func.func @transform_9(%arg0: i32) -> (i32, i32) {
    %c0_i32 = arith.constant 0 : i32
    %c0_i32_0 = arith.constant 0 : i32
    %c0_i32_1 = arith.constant 0 : i32
    return %c0_i32, %c0_i32_0 : i32, i32
  }
  func.func @transform_10(%arg0: i32) -> (i32, i32, i32) {
    %c0_i32 = arith.constant 0 : i32
    %c0_i32_0 = arith.constant 0 : i32
    %c0_i32_1 = arith.constant 0 : i32
    return %arg0, %c0_i32, %c0_i32_0 : i32, i32, i32
  }
}

</mosaic_0001>

<llo_original>
// kernel: tpu_custom_call.1
$region0: #{tpu_custom_call.1}
  #allocation0 [shape = 'u32[]', space=smem, size = 0x4, offset = 0x4, fixed_abs, tag = 'smem constant byte address 0x4 - core index']
  #allocation1 [shape = 'u32[144,128]{1,0:T(1,128)}', space=vmem, size = 0x12000, scoped, tag = 'internal scratch']
  #allocation2 [shape = 'f32[10,10,8]{2,1,0:T(8,128)}', space=vmem, size = 0x14000, scoped, tag = 'scratch operand']
  %s0 = inlined_call_operand.vmem [shape: f32[2,32,64], index: 0, kind: input, shape index: {}]
  %s1 = inlined_call_operand.vmem [shape: f32[8,32], index: 1, kind: input, shape index: {}]
  %s2 = inlined_call_operand.vmem [shape: f32[9,8,8], index: 2, kind: input, shape index: {}]
  %s3 = inlined_call_operand.vmem [shape: f32[32,8], index: 3, kind: input, shape index: {}]
  %s4 = inlined_call_operand.vmem [shape: f32[8,1], index: 4, kind: input, shape index: {}]
  %s5 = inlined_call_operand.vmem [shape: f32[8,1], index: 5, kind: input, shape index: {}]
  %s6 = inlined_call_operand.vmem [shape: f32[1,8], index: 6, kind: input, shape index: {}]
  %s7 = inlined_call_operand.vmem [shape: f32[1,8], index: 7, kind: input, shape index: {}]
  %s8 = inlined_call_operand.vmem [shape: f32[32,1], index: 8, kind: input, shape index: {}]
  %s9 = inlined_call_operand.vmem [shape: f32[32,1], index: 9, kind: input, shape index: {}]
  %s10 = inlined_call_operand.hbm [shape: f32[2,32,64], index: 10, kind: output, shape index: {}]
  %s11 = sld [smem:[#allocation0]]
  $region73: #{tpu_custom_call.1} parent=0
    _
  %s13 = ssub.s32 1, %s11
  %s14 = scalar_select 0, %s13, %s11
  $region1: #{tpu_custom_call.1} parent=0
    #allocation3 [shape = 'u8[32768]{0}', space=vmem, size = 0x8000, scoped, tag = 'output window, operand 0']
    #allocation4 [shape = 's32[2]{0}', space=sflag, size = 0x8, scoped, tag = 'scoped memory for tpu_custom_call.1']
    %15 = vsyncpa [#allocation4], 0
    %s16 = scalar_lea.sflag [#allocation4], 1
    %17 = vsyncpa %s16, 0
    loop: start=0, step=1, limit=4
    $region2: #{tpu_custom_call.1} parent=1 // loop_pre_header
      _
    $region3: #{tpu_custom_call.1} parent=1 // loop_header
      %s19 = sphi 0, %s23
      %p20 = scmp.ge.s32.totalorder %s19, 4
      %s29 = sphi 0, %s31
      %s32 = sphi 0, %s29
      %s33 = sphi 0, %s32
      %s49 = sphi 0, %s33
      %s53 = sphi 0, %s53
      %s55 = sphi 0, %s53
      %s56 = sphi 0, %s55
      %s70 = sphi 0, %s56
      %s74 = sphi 0, %s74
      %s76 = sphi 0, %s74
      %s77 = sphi 0, %s76
      %s91 = sphi 0, %s77
      %s95 = sphi 0, %s95
      %s97 = sphi 0, %s95
      %s98 = sphi 0, %s97
      %s112 = sphi 0, %s98
      %s116 = sphi 0, %s116
      %s118 = sphi 0, %s116
      %s119 = sphi 0, %s118
      %s133 = sphi 0, %s119
      %s137 = sphi 0, %s137
      %s139 = sphi 0, %s137
      %s140 = sphi 0, %s139
      %s154 = sphi 0, %s140
      %s158 = sphi 0, %s158
      %s160 = sphi 0, %s158
      %s161 = sphi 0, %s160
      %s175 = sphi 0, %s161
      %s179 = sphi 0, %s179
      %s181 = sphi 0, %s179
      %s182 = sphi 0, %s181
      %s196 = sphi 0, %s182
      %s200 = sphi 0, %s200
      %s202 = sphi 0, %s200
      %s203 = sphi 0, %s202
      %s217 = sphi 0, %s203
      %s221 = sphi 0, %s221
      %s223 = sphi 0, %s221
      %s224 = sphi 0, %s223
      %s238 = sphi 0, %s224
      %s244 = sphi 0, %s246
      %s247 = sphi 0, %s244
      %s248 = sphi 0, %s247
      %s264 = sphi 0, %s248
    $region4: #{tpu_custom_call.1} parent=1 // loop_header_branch
      %22 = sbr.rel (%p20) target = $region8
    $region5: #{tpu_custom_call.1} parent=1 // loop_body
      %s24 = ssub.s32 %s19, 1
      %s25 = ssub.s32 %s19, 2
      %s26 = sadd.s32 %s19, 1
      %s27 = ssub.s32 %s19, %s26
      %p28 = scmp.eq.s32.totalorder %s27, 0
      %s30 = sadd.s32 %s29, 1
      %s31 = scalar_select %p28, %s29, %s30
      %p34 = pneg %p28
      %p35 = scmp.eq.s32.totalorder %s19, 1
      %p36 = por %p34, %p35
      %p37 = scmp.ne.s32.totalorder %s29, %s32
      %p38 = scmp.eq.s32.totalorder %s19, 0
      %p39 = por %p37, %p38
      %p40 = scmp.ne.s32.totalorder %s29, %s32
      %p41 = scmp.eq.s32.totalorder %s24, 1
      %p42 = por %p40, %p41
      %p43 = scmp.ne.s32.totalorder %s32, %s33
      %p44 = scmp.eq.s32.totalorder %s24, 0
      %p45 = por %p43, %p44
      %p46 = scmp.ne.s32.totalorder %s32, %s33
      %p47 = scmp.eq.s32.totalorder %s25, 1
      %p48 = por %p46, %p47
      %p50 = scmp.ne.s32.totalorder %s33, %s49
      %p51 = scmp.eq.s32.totalorder %s25, 0
      %p52 = por %p50, %p51
      %s54 = sadd.s32 %s53, 1
      %p57 = scmp.eq.s32.totalorder %s19, 1
      %p58 = scmp.ne.s32.totalorder %s53, %s55
      %p59 = scmp.eq.s32.totalorder %s19, 0
      %p60 = por %p58, %p59
      %p61 = scmp.ne.s32.totalorder %s53, %s55
      %p62 = scmp.eq.s32.totalorder %s24, 1
      %p63 = por %p61, %p62
      %p64 = scmp.ne.s32.totalorder %s55, %s56
      %p65 = scmp.eq.s32.totalorder %s24, 0
      %p66 = por %p64, %p65
      %p67 = scmp.ne.s32.totalorder %s55, %s56
      %p68 = scmp.eq.s32.totalorder %s25, 1
      %p69 = por %p67, %p68
      %p71 = scmp.ne.s32.totalorder %s56, %s70
      %p72 = scmp.eq.s32.totalorder %s25, 0
      %p73 = por %p71, %p72
      %s75 = sadd.s32 %s74, 1
      %p78 = scmp.eq.s32.totalorder %s19, 1
      %p79 = scmp.ne.s32.totalorder %s74, %s76
      %p80 = scmp.eq.s32.totalorder %s19, 0
      %p81 = por %p79, %p80
      %p82 = scmp.ne.s32.totalorder %s74, %s76
      %p83 = scmp.eq.s32.totalorder %s24, 1
      %p84 = por %p82, %p83
      %p85 = scmp.ne.s32.totalorder %s76, %s77
      %p86 = scmp.eq.s32.totalorder %s24, 0
      %p87 = por %p85, %p86
      %p88 = scmp.ne.s32.totalorder %s76, %s77
      %p89 = scmp.eq.s32.totalorder %s25, 1
      %p90 = por %p88, %p89
      %p92 = scmp.ne.s32.totalorder %s77, %s91
      %p93 = scmp.eq.s32.totalorder %s25, 0
      %p94 = por %p92, %p93
      %s96 = sadd.s32 %s95, 1
      %p99 = scmp.eq.s32.totalorder %s19, 1
      %p100 = scmp.ne.s32.totalorder %s95, %s97
      %p101 = scmp.eq.s32.totalorder %s19, 0
      %p102 = por %p100, %p101
      %p103 = scmp.ne.s32.totalorder %s95, %s97
      %p104 = scmp.eq.s32.totalorder %s24, 1
      %p105 = por %p103, %p104
      %p106 = scmp.ne.s32.totalorder %s97, %s98
      %p107 = scmp.eq.s32.totalorder %s24, 0
      %p108 = por %p106, %p107
      %p109 = scmp.ne.s32.totalorder %s97, %s98
      %p110 = scmp.eq.s32.totalorder %s25, 1
      %p111 = por %p109, %p110
      %p113 = scmp.ne.s32.totalorder %s98, %s112
      %p114 = scmp.eq.s32.totalorder %s25, 0
      %p115 = por %p113, %p114
      %s117 = sadd.s32 %s116, 1
      %p120 = scmp.eq.s32.totalorder %s19, 1
      %p121 = scmp.ne.s32.totalorder %s116, %s118
      %p122 = scmp.eq.s32.totalorder %s19, 0
      %p123 = por %p121, %p122
      %p124 = scmp.ne.s32.totalorder %s116, %s118
      %p125 = scmp.eq.s32.totalorder %s24, 1
      %p126 = por %p124, %p125
      %p127 = scmp.ne.s32.totalorder %s118, %s119
      %p128 = scmp.eq.s32.totalorder %s24, 0
      %p129 = por %p127, %p128
      %p130 = scmp.ne.s32.totalorder %s118, %s119
      %p131 = scmp.eq.s32.totalorder %s25, 1
      %p132 = por %p130, %p131
      %p134 = scmp.ne.s32.totalorder %s119, %s133
      %p135 = scmp.eq.s32.totalorder %s25, 0
      %p136 = por %p134, %p135
      %s138 = sadd.s32 %s137, 1
      %p141 = scmp.eq.s32.totalorder %s19, 1
      %p142 = scmp.ne.s32.totalorder %s137, %s139
      %p143 = scmp.eq.s32.totalorder %s19, 0
      %p144 = por %p142, %p143
      %p145 = scmp.ne.s32.totalorder %s137, %s139
      %p146 = scmp.eq.s32.totalorder %s24, 1
      %p147 = por %p145, %p146
      %p148 = scmp.ne.s32.totalorder %s139, %s140
      %p149 = scmp.eq.s32.totalorder %s24, 0
      %p150 = por %p148, %p149
      %p151 = scmp.ne.s32.totalorder %s139, %s140
      %p152 = scmp.eq.s32.totalorder %s25, 1
      %p153 = por %p151, %p152
      %p155 = scmp.ne.s32.totalorder %s140, %s154
      %p156 = scmp.eq.s32.totalorder %s25, 0
      %p157 = por %p155, %p156
      %s159 = sadd.s32 %s158, 1
      %p162 = scmp.eq.s32.totalorder %s19, 1
      %p163 = scmp.ne.s32.totalorder %s158, %s160
      %p164 = scmp.eq.s32.totalorder %s19, 0
      %p165 = por %p163, %p164
      %p166 = scmp.ne.s32.totalorder %s158, %s160
      %p167 = scmp.eq.s32.totalorder %s24, 1
      %p168 = por %p166, %p167
      %p169 = scmp.ne.s32.totalorder %s160, %s161
      %p170 = scmp.eq.s32.totalorder %s24, 0
      %p171 = por %p169, %p170
      %p172 = scmp.ne.s32.totalorder %s160, %s161
      %p173 = scmp.eq.s32.totalorder %s25, 1
      %p174 = por %p172, %p173
      %p176 = scmp.ne.s32.totalorder %s161, %s175
      %p177 = scmp.eq.s32.totalorder %s25, 0
      %p178 = por %p176, %p177
      %s180 = sadd.s32 %s179, 1
      %p183 = scmp.eq.s32.totalorder %s19, 1
      %p184 = scmp.ne.s32.totalorder %s179, %s181
      %p185 = scmp.eq.s32.totalorder %s19, 0
      %p186 = por %p184, %p185
      %p187 = scmp.ne.s32.totalorder %s179, %s181
      %p188 = scmp.eq.s32.totalorder %s24, 1
      %p189 = por %p187, %p188
      %p190 = scmp.ne.s32.totalorder %s181, %s182
      %p191 = scmp.eq.s32.totalorder %s24, 0
      %p192 = por %p190, %p191
      %p193 = scmp.ne.s32.totalorder %s181, %s182
      %p194 = scmp.eq.s32.totalorder %s25, 1
      %p195 = por %p193, %p194
      %p197 = scmp.ne.s32.totalorder %s182, %s196
      %p198 = scmp.eq.s32.totalorder %s25, 0
      %p199 = por %p197, %p198
      %s201 = sadd.s32 %s200, 1
      %p204 = scmp.eq.s32.totalorder %s19, 1
      %p205 = scmp.ne.s32.totalorder %s200, %s202
      %p206 = scmp.eq.s32.totalorder %s19, 0
      %p207 = por %p205, %p206
      %p208 = scmp.ne.s32.totalorder %s200, %s202
      %p209 = scmp.eq.s32.totalorder %s24, 1
      %p210 = por %p208, %p209
      %p211 = scmp.ne.s32.totalorder %s202, %s203
      %p212 = scmp.eq.s32.totalorder %s24, 0
      %p213 = por %p211, %p212
      %p214 = scmp.ne.s32.totalorder %s202, %s203
      %p215 = scmp.eq.s32.totalorder %s25, 1
      %p216 = por %p214, %p215
      %p218 = scmp.ne.s32.totalorder %s203, %s217
      %p219 = scmp.eq.s32.totalorder %s25, 0
      %p220 = por %p218, %p219
      %s222 = sadd.s32 %s221, 1
      %p225 = scmp.eq.s32.totalorder %s19, 1
      %p226 = scmp.ne.s32.totalorder %s221, %s223
      %p227 = scmp.eq.s32.totalorder %s19, 0
      %p228 = por %p226, %p227
      %p229 = scmp.ne.s32.totalorder %s221, %s223
      %p230 = scmp.eq.s32.totalorder %s24, 1
      %p231 = por %p229, %p230
      %p232 = scmp.ne.s32.totalorder %s223, %s224
      %p233 = scmp.eq.s32.totalorder %s24, 0
      %p234 = por %p232, %p233
      %p235 = scmp.ne.s32.totalorder %s223, %s224
      %p236 = scmp.eq.s32.totalorder %s25, 1
      %p237 = por %p235, %p236
      %p239 = scmp.ne.s32.totalorder %s224, %s238
      %p240 = scmp.eq.s32.totalorder %s25, 0
      %p241 = por %p239, %p240
      %s242 = ssub.s32 %s19, %s26
      %p243 = scmp.eq.s32.totalorder %s242, 0
      %s245 = sadd.s32 %s244, 1
      %s246 = scalar_select %p243, %s244, %s245
      %p249 = pneg %p243
      %p250 = scmp.eq.s32.totalorder %s19, 1
      %p251 = por %p249, %p250
      %p252 = scmp.ne.s32.totalorder %s244, %s247
      %p253 = scmp.eq.s32.totalorder %s19, 0
      %p254 = por %p252, %p253
      %p255 = scmp.ne.s32.totalorder %s244, %s247
      %p256 = scmp.eq.s32.totalorder %s24, 1
      %p257 = por %p255, %p256
      %p258 = scmp.ne.s32.totalorder %s247, %s248
      %p259 = scmp.eq.s32.totalorder %s24, 0
      %p260 = por %p258, %p259
      %p261 = scmp.ne.s32.totalorder %s247, %s248
      %p262 = scmp.eq.s32.totalorder %s25, 1
      %p263 = por %p261, %p262
      %p265 = scmp.ne.s32.totalorder %s248, %s264
      %p266 = scmp.eq.s32.totalorder %s25, 0
      %p267 = por %p265, %p266
      %p268 = scmp.le.s32.totalorder 1, %s19
      %p269 = scmp.lt.s32.totalorder %s19, 3
      %p270 = pnand %p268, %p269
      %p271 = pneg %p270
      // Predicated region
      $region9: #{tpu_custom_call.1} parent=5 // pred_check
        _
      $region10: #{tpu_custom_call.1} parent=5 // pred_check_branch
        %273 = sbr.rel (%p270) target = $region12
      $region11: #{tpu_custom_call.1} parent=5 // pred_region
        %s274 = ssub.s32 %s19, 1
        // Predicated region
        $region13: #{tpu_custom_call.1} parent=11 // pred_check
          %p275 = pneg %p66
        $region14: #{tpu_custom_call.1} parent=11 // pred_check_branch
          %277 = sbr.rel (%p275) target = $region16
        $region15: #{tpu_custom_call.1} parent=11 // pred_region
          _
        $region16: #{tpu_custom_call.1} parent=11 // pred_fallthru
          _
        // Predicated region
        $region17: #{tpu_custom_call.1} parent=11 // pred_check
          %p278 = pneg %p87
        $region18: #{tpu_custom_call.1} parent=11 // pred_check_branch
          %280 = sbr.rel (%p278) target = $region20
        $region19: #{tpu_custom_call.1} parent=11 // pred_region
          _
        $region20: #{tpu_custom_call.1} parent=11 // pred_fallthru
          _
        // Predicated region
        $region21: #{tpu_custom_call.1} parent=11 // pred_check
          %p281 = pneg %p108
        $region22: #{tpu_custom_call.1} parent=11 // pred_check_branch
          %283 = sbr.rel (%p281) target = $region24
        $region23: #{tpu_custom_call.1} parent=11 // pred_region
          _
        $region24: #{tpu_custom_call.1} parent=11 // pred_fallthru
          _
        // Predicated region
        $region25: #{tpu_custom_call.1} parent=11 // pred_check
          %p284 = pneg %p129
        $region26: #{tpu_custom_call.1} parent=11 // pred_check_branch
          %286 = sbr.rel (%p284) target = $region28
        $region27: #{tpu_custom_call.1} parent=11 // pred_region
          _
        $region28: #{tpu_custom_call.1} parent=11 // pred_fallthru
          _
        // Predicated region
        $region29: #{tpu_custom_call.1} parent=11 // pred_check
          %p287 = pneg %p150
        $region30: #{tpu_custom_call.1} parent=11 // pred_check_branch
          %289 = sbr.rel (%p287) target = $region32
        $region31: #{tpu_custom_call.1} parent=11 // pred_region
          _
        $region32: #{tpu_custom_call.1} parent=11 // pred_fallthru
          _
        // Predicated region
        $region33: #{tpu_custom_call.1} parent=11 // pred_check
          %p290 = pneg %p171
        $region34: #{tpu_custom_call.1} parent=11 // pred_check_branch
          %292 = sbr.rel (%p290) target = $region36
        $region35: #{tpu_custom_call.1} parent=11 // pred_region
          _
        $region36: #{tpu_custom_call.1} parent=11 // pred_fallthru
          _
        // Predicated region
        $region37: #{tpu_custom_call.1} parent=11 // pred_check
          %p293 = pneg %p192
        $region38: #{tpu_custom_call.1} parent=11 // pred_check_branch
          %295 = sbr.rel (%p293) target = $region40
        $region39: #{tpu_custom_call.1} parent=11 // pred_region
          _
        $region40: #{tpu_custom_call.1} parent=11 // pred_fallthru
          _
        // Predicated region
        $region41: #{tpu_custom_call.1} parent=11 // pred_check
          %p296 = pneg %p213
        $region42: #{tpu_custom_call.1} parent=11 // pred_check_branch
          %298 = sbr.rel (%p296) target = $region44
        $region43: #{tpu_custom_call.1} parent=11 // pred_region
          _
        $region44: #{tpu_custom_call.1} parent=11 // pred_fallthru
          _
        // Predicated region
        $region45: #{tpu_custom_call.1} parent=11 // pred_check
          %p299 = pneg %p234
        $region46: #{tpu_custom_call.1} parent=11 // pred_check_branch
          %301 = sbr.rel (%p299) target = $region48
        $region47: #{tpu_custom_call.1} parent=11 // pred_region
          _
        $region48: #{tpu_custom_call.1} parent=11 // pred_fallthru
          _
      $region12: #{tpu_custom_call.1} parent=5 // pred_fallthru
        _
      %p302 = scmp.lt.s32.totalorder %s19, 2
      // Predicated region
      $region49: #{tpu_custom_call.1} parent=5 // pred_check
        %p303 = pneg %p302
      $region50: #{tpu_custom_call.1} parent=5 // pred_check_branch
        %305 = sbr.rel (%p303) target = $region52
      $region51: #{tpu_custom_call.1} parent=5 // pred_region
        // Predicated region
        $region53: #{tpu_custom_call.1} parent=51 // pred_check
          %p306 = pneg %p39
        $region54: #{tpu_custom_call.1} parent=51 // pred_check_branch
          %308 = sbr.rel (%p306) target = $region56
        $region55: #{tpu_custom_call.1} parent=51 // pred_region
          %p309 = scmp.lt.s32.totalorder %s19, 1
          %s310 = scalar_select %p309, %s19, 1
          %s311 = smul.addr %s310, 4
          %s312 = smul.addr %s311, 8
          %s313 = scalar_lea.vmem %s0, %s312
        $region56: #{tpu_custom_call.1} parent=51 // pred_fallthru
          _
      $region52: #{tpu_custom_call.1} parent=5 // pred_fallthru
        _
      %p314 = scmp.le.s32.totalorder 1, %s19
      %p315 = scmp.lt.s32.totalorder %s19, 3
      %p316 = pnand %p314, %p315
      %p317 = pneg %p316
      // Predicated region
      $region57: #{tpu_custom_call.1} parent=5 // pred_check
        _
      $region58: #{tpu_custom_call.1} parent=5 // pred_check_branch
        %319 = sbr.rel (%p316) target = $region60
      $region59: #{tpu_custom_call.1} parent=5 // pred_region
        %s320 = ssub.s32 %s19, 1
        %p321 = scmp.lt.s32.totalorder %s24, 1
        %s322 = scalar_select %p321, %s24, 1
        %s323 = smul.addr %s322, 4
        %s324 = smul.addr %s323, 8
        %s325 = scalar_lea.vmem %s0, %s324
        %p326 = pneg %p45
        %p327 = pneg %p42
        %p328 = pneg %p66
        %p329 = pneg %p63
        %p330 = pneg %p87
        %p331 = pneg %p84
        %p332 = pneg %p108
        %p333 = pneg %p105
        %p334 = pneg %p129
        %p335 = pneg %p126
        %p336 = pneg %p150
        %p337 = pneg %p147
        %p338 = pneg %p171
        %p339 = pneg %p168
        %p340 = pneg %p192
        %p341 = pneg %p189
        %p342 = pneg %p213
        %p343 = pneg %p210
        %p344 = pneg %p234
        %p345 = pneg %p231
        %p346 = pneg %p260
        %p347 = pneg %p257
        %s348 = sand.u32 %s247, 1
        %s349 = scalar_lea.sflag [#allocation4], %s348
        %s350 = sand.u32 %s247, 1
        %s351 = smul.addr %s350, 32
        %s352 = scalar_lea.vmem [#allocation3], %s351
        %p353 = scmp.lt.s32.totalorder %s24, 1
        %s354 = scalar_select %p353, %s24, 1
        %s355 = smul.addr %s354, 4
        %s356 = smul.addr %s355, 8
        %s357 = scalar_lea.vmem %s0, %s356
        %v358 = vld [vmem:[%s357] sm:$0xff]
        %v359 = vld [vmem:[%s357 + $0x8] sm:$0xff]
        %v360 = vld [vmem:[%s357 + $0x10] sm:$0xff]
        %v361 = vld [vmem:[%s357 + $0x18] sm:$0xff]
        %v362 = vld [vmem:[%s1] sm:$0xff]
        %vm363 = vcmask 261120
        %v365 = vsel %vm363, %v362, 0
        %367 = vmatprep.subr.mxu0 0.0
        %368 = vmatpush1.msra.mxu0 0.0
        %369 = vmatprep.subr.mxu0 0.0
        %370 = vmatpush1.msra.mxu0 0.0
        %371 = vmatprep.subr.mxu0 0.0
        %372 = vmatpush1.msra.mxu0 0.0
        %373 = vmatprep.subr.mxu0 0.0
        %374 = vmatpush1.msra.mxu0 0.0
        %375 = vmatprep.subr.mxu0 0.0
        %376 = vmatpush1.msra.mxu0 0.0
        %377 = vmatprep.subr.mxu0 0.0
        %378 = vmatpush1.msra.mxu0 0.0
        %379 = vmatprep.subr.mxu0 0.0
        %380 = vmatpush1.msra.mxu0 0.0
        %381 = vmatprep.subr.mxu0 0.0
        %382 = vmatpush1.msra.mxu0 0.0
        %383 = vmatprep.subr.mxu0 0.0
        %384 = vmatpush1.msra.mxu0 0.0
        %385 = vmatprep.subr.mxu0 0.0
        %386 = vmatpush1.msra.mxu0 0.0
        %387 = vmatprep.subr.mxu0 0.0
        %388 = vmatpush1.msra.mxu0 0.0
        %389 = vmatprep.subr.mxu0 0.0
        %390 = vmatpush1.msra.mxu0 0.0
        %391 = vmatprep.subr.mxu0 0.0
        %392 = vmatpush1.msra.mxu0 %v361
        %393 = vmatprep.subr.mxu0 0.0
        %394 = vmatpush1.msra.mxu0 %v360
        %395 = vmatprep.subr.mxu0 0.0
        %396 = vmatpush1.msra.mxu0 %v359
        %397 = vmatprep.subr.mxu0 0.0
        %398 = vmatpush1.msra.mxu0 %v358
        %399 = vmatprep.subr.mxu0 0.0
        %400 = vmatpush2.msra.mxu0 0.0
        %401 = vmatprep.subr.mxu0 0.0
        %402 = vmatpush2.msra.mxu0 0.0
        %403 = vmatprep.subr.mxu0 0.0
        %404 = vmatpush2.msra.mxu0 0.0
        %405 = vmatprep.subr.mxu0 0.0
        %406 = vmatpush2.msra.mxu0 0.0
        %407 = vmatprep.subr.mxu0 0.0
        %408 = vmatpush2.msra.mxu0 0.0
        %409 = vmatprep.subr.mxu0 0.0
        %410 = vmatpush2.msra.mxu0 0.0
        %411 = vmatprep.subr.mxu0 0.0
        %412 = vmatpush2.msra.mxu0 0.0
        %413 = vmatprep.subr.mxu0 0.0
        %414 = vmatpush2.msra.mxu0 0.0
        %415 = vmatprep.subr.mxu0 0.0
        %416 = vmatpush2.msra.mxu0 0.0
        %417 = vmatprep.subr.mxu0 0.0
        %418 = vmatpush2.msra.mxu0 0.0
        %419 = vmatprep.subr.mxu0 0.0
        %420 = vmatpush2.msra.mxu0 0.0
        %421 = vmatprep.subr.mxu0 0.0
        %422 = vmatpush2.msra.mxu0 0.0
        %423 = vmatprep.subr.mxu0 0.0
        %424 = vmatpush2.msra.mxu0 0.0
        %425 = vmatprep.subr.mxu0 0.0
        %426 = vmatpush2.msra.mxu0 0.0
        %427 = vmatprep.subr.mxu0 0.0
        %428 = vmatpush2.msra.mxu0 0.0
        %429 = vmatprep.subr.mxu0 0.0
        %430 = vmatpush2.msra.mxu0 0.0
        %431 = vmatprep.mubr.f32.mxu0 0.0
        %432 = vmatmul.mubr.f32.gmra.mxu0 %v365
        %v433 = vpop.f32.mrf.mxu0
        %v434 = vadd.f32 0.0, %v433
        %v435 = vpop.f32.mrf.mxu0
        %436 = vdwg.mxu0
        %v437 = vld [vmem:[%s4] sm:$0xff]
        %439 = vset.pattern.permute.xlu0 0
        %440 = vperm.xlu0 %439, %v437
        %v441 = vpop.permute.xlu0 %440
        %v443 = vmul.f32 %v434, %v441
        %v444 = vld [vmem:[%s5] sm:$0xff]
        %446 = vset.pattern.permute.xlu0 0
        %447 = vperm.xlu0 %446, %v444
        %v448 = vpop.permute.xlu0 %447
        %v450 = vadd.f32 %v443, %v448
        %v451 = vmax.f32 %v450, 0.0
        %452 = vxpose.xlu0.b32.start [1/16] %v451, 128
        %453 = vxpose.xlu0.b32.cont [2/16] 0.0, 128
        %454 = vxpose.xlu0.b32.cont [3/16] 0.0, 128
        %455 = vxpose.xlu0.b32.cont [4/16] 0.0, 128
        %456 = vxpose.xlu0.b32.cont [5/16] 0.0, 128
        %457 = vxpose.xlu0.b32.cont [6/16] 0.0, 128
        %458 = vxpose.xlu0.b32.cont [7/16] 0.0, 128
        %459 = vxpose.xlu0.b32.cont [8/16] 0.0, 128
        %460 = vxpose.xlu0.b32.cont [9/16] 0.0, 128
        %461 = vxpose.xlu0.b32.cont [10/16] 0.0, 128
        %462 = vxpose.xlu0.b32.cont [11/16] 0.0, 128
        %463 = vxpose.xlu0.b32.cont [12/16] 0.0, 128
        %464 = vxpose.xlu0.b32.cont [13/16] 0.0, 128
        %465 = vxpose.xlu0.b32.cont [14/16] 0.0, 128
        %466 = vxpose.xlu0.b32.cont [15/16] 0.0, 128
        %467 = vxpose.xlu0.b32.end [16/16] 0.0, 128
        %v468 = vpop.trf.xlu0
        %v469 = vpop.trf.xlu0
        %v470 = vpop.trf.xlu0
        %v471 = vpop.trf.xlu0
        %v472 = vpop.trf.xlu0
        %v473 = vpop.trf.xlu0
        %v474 = vpop.trf.xlu0
        %v475 = vpop.trf.xlu0
        %v476 = vpop.trf.xlu0
        %v477 = vpop.trf.xlu0
        %v478 = vpop.trf.xlu0
        %v479 = vpop.trf.xlu0
        %v480 = vpop.trf.xlu0
        %v481 = vpop.trf.xlu0
        %v482 = vpop.trf.xlu0
        %v483 = vpop.trf.xlu0
        %vm484 = vcmask 64512
        %485 = vst.msk [vmem:[#allocation2] sm:$0xff] %vm484, 0.0
        %vm486 = vcmask 58368
        %487 = vst.msk [vmem:[#allocation2 + $0x8] sm:$0x3] %vm486, 0.0
        %488 = vst.msk [vmem:[#allocation2 + $0x10] sm:$0xff] %vm484, 0.0
        %489 = vst.msk [vmem:[#allocation2 + $0x18] sm:$0x3] %vm486, 0.0
        %490 = vst.msk [vmem:[#allocation2 + $0x20] sm:$0xff] %vm484, 0.0
        %491 = vst.msk [vmem:[#allocation2 + $0x28] sm:$0x3] %vm486, 0.0
        %492 = vst.msk [vmem:[#allocation2 + $0x30] sm:$0xff] %vm484, 0.0
        %493 = vst.msk [vmem:[#allocation2 + $0x38] sm:$0x3] %vm486, 0.0
        %494 = vst.msk [vmem:[#allocation2 + $0x40] sm:$0xff] %vm484, 0.0
        %495 = vst.msk [vmem:[#allocation2 + $0x48] sm:$0x3] %vm486, 0.0
        %496 = vst.msk [vmem:[#allocation2 + $0x50] sm:$0xff] %vm484, 0.0
        %497 = vst.msk [vmem:[#allocation2 + $0x58] sm:$0x3] %vm486, 0.0
        %498 = vst.msk [vmem:[#allocation2 + $0x60] sm:$0xff] %vm484, 0.0
        %499 = vst.msk [vmem:[#allocation2 + $0x68] sm:$0x3] %vm486, 0.0
        %500 = vst.msk [vmem:[#allocation2 + $0x70] sm:$0xff] %vm484, 0.0
        %501 = vst.msk [vmem:[#allocation2 + $0x78] sm:$0x3] %vm486, 0.0
        %502 = vst.msk [vmem:[#allocation2 + $0x80] sm:$0xff] %vm484, 0.0
        %503 = vst.msk [vmem:[#allocation2 + $0x88] sm:$0x3] %vm486, 0.0
        %504 = vst.msk [vmem:[#allocation2 + $0x90] sm:$0xff] %vm484, 0.0
        %505 = vst.msk [vmem:[#allocation2 + $0x98] sm:$0x3] %vm486, 0.0
        %s506 = scalar_lea.vmem [#allocation2], 16
        %507 = vst.msk [vmem:[%s506 + $0x1] sm:$0xff] %vm484, %v468
        %508 = vst.msk [vmem:[%s506 + $0x11] sm:$0xff] %vm484, %v469
        %509 = vst.msk [vmem:[%s506 + $0x21] sm:$0xff] %vm484, %v470
        %510 = vst.msk [vmem:[%s506 + $0x31] sm:$0xff] %vm484, %v471
        %511 = vst.msk [vmem:[%s506 + $0x41] sm:$0xff] %vm484, %v472
        %512 = vst.msk [vmem:[%s506 + $0x51] sm:$0xff] %vm484, %v473
        %513 = vst.msk [vmem:[%s506 + $0x61] sm:$0xff] %vm484, %v474
        %514 = vst.msk [vmem:[%s506 + $0x71] sm:$0xff] %vm484, %v475
        %v515 = vld [vmem:[#allocation2] sm:$0xff]
        %v516 = vld [vmem:[#allocation2 + $0x10] sm:$0xff]
        %v517 = vld [vmem:[#allocation2 + $0x20] sm:$0xff]
        %v518 = vld [vmem:[#allocation2 + $0x30] sm:$0xff]
        %v519 = vld [vmem:[#allocation2 + $0x40] sm:$0xff]
        %v520 = vld [vmem:[#allocation2 + $0x50] sm:$0xff]
        %v521 = vld [vmem:[#allocation2 + $0x60] sm:$0xff]
        %v522 = vld [vmem:[#allocation2 + $0x70] sm:$0xff]
        %v523 = vld [vmem:[%s2] sm:$0xff]
        %v524 = vld [vmem:[#allocation2 + $0x1] sm:$0xff]
        %v525 = vld [vmem:[#allocation2 + $0x11] sm:$0xff]
        %v526 = vld [vmem:[#allocation2 + $0x21] sm:$0xff]
        %v527 = vld [vmem:[#allocation2 + $0x31] sm:$0xff]
        %v528 = vld [vmem:[#allocation2 + $0x41] sm:$0xff]
        %v529 = vld [vmem:[#allocation2 + $0x51] sm:$0xff]
        %v530 = vld [vmem:[#allocation2 + $0x61] sm:$0xff]
        %v531 = vld [vmem:[#allocation2 + $0x71] sm:$0xff]
        %s532 = scalar_lea.vmem %s2, 8
        %v533 = vld [vmem:[%s532] sm:$0xff]
        %v535 = vsel %vm484, %v524, 0
        %v538 = vsel %vm484, %v525, 0
        %v541 = vsel %vm484, %v526, 0
        %v544 = vsel %vm484, %v527, 0
        %v547 = vsel %vm484, %v528, 0
        %v550 = vsel %vm484, %v529, 0
        %v553 = vsel %vm484, %v530, 0
        %v556 = vsel %vm484, %v531, 0
        %558 = vmatprep.subr.mxu0 0.0
        %559 = vmatpush1.msra.mxu0 0.0
        %560 = vmatprep.subr.mxu0 0.0
        %561 = vmatpush1.msra.mxu0 0.0
        %562 = vmatprep.subr.mxu0 0.0
        %563 = vmatpush1.msra.mxu0 0.0
        %564 = vmatprep.subr.mxu0 0.0
        %565 = vmatpush1.msra.mxu0 0.0
        %566 = vmatprep.subr.mxu0 0.0
        %567 = vmatpush1.msra.mxu0 0.0
        %568 = vmatprep.subr.mxu0 0.0
        %569 = vmatpush1.msra.mxu0 0.0
        %570 = vmatprep.subr.mxu0 0.0
        %571 = vmatpush1.msra.mxu0 0.0
        %572 = vmatprep.subr.mxu0 0.0
        %573 = vmatpush1.msra.mxu0 0.0
        %574 = vmatprep.subr.mxu0 0.0
        %575 = vmatpush1.msra.mxu0 0.0
        %576 = vmatprep.subr.mxu0 0.0
        %577 = vmatpush1.msra.mxu0 0.0
        %578 = vmatprep.subr.mxu0 0.0
        %579 = vmatpush1.msra.mxu0 0.0
        %580 = vmatprep.subr.mxu0 0.0
        %581 = vmatpush1.msra.mxu0 0.0
        %582 = vmatprep.subr.mxu0 0.0
        %583 = vmatpush1.msra.mxu0 0.0
        %584 = vmatprep.subr.mxu0 0.0
        %585 = vmatpush1.msra.mxu0 0.0
        %586 = vmatprep.subr.mxu0 0.0
        %587 = vmatpush1.msra.mxu0 0.0
        %588 = vmatprep.subr.mxu0 0.0
        %589 = vmatpush1.msra.mxu0 %v533
        %590 = vmatprep.subr.mxu0 0.0
        %591 = vmatpush2.msra.mxu0 0.0
        %592 = vmatprep.subr.mxu0 0.0
        %593 = vmatpush2.msra.mxu0 0.0
        %594 = vmatprep.subr.mxu0 0.0
        %595 = vmatpush2.msra.mxu0 0.0
        %596 = vmatprep.subr.mxu0 0.0
        %597 = vmatpush2.msra.mxu0 0.0
        %598 = vmatprep.subr.mxu0 0.0
        %599 = vmatpush2.msra.mxu0 0.0
        %600 = vmatprep.subr.mxu0 0.0
        %601 = vmatpush2.msra.mxu0 0.0
        %602 = vmatprep.subr.mxu0 0.0
        %603 = vmatpush2.msra.mxu0 0.0
        %604 = vmatprep.subr.mxu0 0.0
        %605 = vmatpush2.msra.mxu0 0.0
        %606 = vmatprep.subr.mxu0 0.0
        %607 = vmatpush2.msra.mxu0 0.0
        %608 = vmatprep.subr.mxu0 0.0
        %609 = vmatpush2.msra.mxu0 0.0
        %610 = vmatprep.subr.mxu0 0.0
        %611 = vmatpush2.msra.mxu0 0.0
        %612 = vmatprep.subr.mxu0 0.0
        %613 = vmatpush2.msra.mxu0 0.0
        %614 = vmatprep.subr.mxu0 0.0
        %615 = vmatpush2.msra.mxu0 0.0
        %616 = vmatprep.subr.mxu0 0.0
        %617 = vmatpush2.msra.mxu0 0.0
        %618 = vmatprep.subr.mxu0 0.0
        %619 = vmatpush2.msra.mxu0 0.0
        %620 = vmatprep.subr.mxu0 0.0
        %621 = vmatpush2.msra.mxu0 0.0
        %622 = vmatprep.mubr.f32.mxu0 0.0
        %623 = vmatmul.mubr.f32.gmra.mxu0 %v535
        %v624 = vpop.f32.mrf.mxu0
        %v625 = vadd.f32 0.0, %v624
        %v626 = vpop.f32.mrf.mxu0
        %627 = vmatprep.mubr.f32.mxu0 0.0
        %628 = vmatmul.mubr.f32.gmra.mxu0 %v538
        %v629 = vpop.f32.mrf.mxu0
        %v630 = vadd.f32 0.0, %v629
        %v631 = vpop.f32.mrf.mxu0
        %632 = vmatprep.mubr.f32.mxu0 0.0
        %633 = vmatmul.mubr.f32.gmra.mxu0 %v541
        %v634 = vpop.f32.mrf.mxu0
        %v635 = vadd.f32 0.0, %v634
        %v636 = vpop.f32.mrf.mxu0
        %637 = vmatprep.mubr.f32.mxu0 0.0
        %638 = vmatmul.mubr.f32.gmra.mxu0 %v544
        %v639 = vpop.f32.mrf.mxu0
        %v640 = vadd.f32 0.0, %v639
        %v641 = vpop.f32.mrf.mxu0
        %642 = vmatprep.mubr.f32.mxu0 0.0
        %643 = vmatmul.mubr.f32.gmra.mxu0 %v547
        %v644 = vpop.f32.mrf.mxu0
        %v645 = vadd.f32 0.0, %v644
        %v646 = vpop.f32.mrf.mxu0
        %647 = vmatprep.mubr.f32.mxu0 0.0
        %648 = vmatmul.mubr.f32.gmra.mxu0 %v550
        %v649 = vpop.f32.mrf.mxu0
        %v650 = vadd.f32 0.0, %v649
        %v651 = vpop.f32.mrf.mxu0
        %652 = vmatprep.mubr.f32.mxu0 0.0
        %653 = vmatmul.mubr.f32.gmra.mxu0 %v553
        %v654 = vpop.f32.mrf.mxu0
        %v655 = vadd.f32 0.0, %v654
        %v656 = vpop.f32.mrf.mxu0
        %657 = vmatprep.mubr.f32.mxu0 0.0
        %658 = vmatmul.mubr.f32.gmra.mxu0 %v556
        %v659 = vpop.f32.mrf.mxu0
        %v660 = vadd.f32 0.0, %v659
        %v661 = vpop.f32.mrf.mxu0
        %662 = vdwg.mxu0
        %v664 = vsel %vm484, %v515, 0
        %v667 = vsel %vm484, %v516, 0
        %v670 = vsel %vm484, %v517, 0
        %v673 = vsel %vm484, %v518, 0
        %v676 = vsel %vm484, %v519, 0
        %v679 = vsel %vm484, %v520, 0
        %v682 = vsel %vm484, %v521, 0
        %v685 = vsel %vm484, %v522, 0
        %687 = vmatprep.subr.mxu0 0.0
        %688 = vmatpush1.msra.mxu0 0.0
        %689 = vmatprep.subr.mxu0 0.0
        %690 = vmatpush1.msra.mxu0 0.0
        %691 = vmatprep.subr.mxu0 0.0
        %692 = vmatpush1.msra.mxu0 0.0
        %693 = vmatprep.subr.mxu0 0.0
        %694 = vmatpush1.msra.mxu0 0.0
        %695 = vmatprep.subr.mxu0 0.0
        %696 = vmatpush1.msra.mxu0 0.0
        %697 = vmatprep.subr.mxu0 0.0
        %698 = vmatpush1.msra.mxu0 0.0
        %699 = vmatprep.subr.mxu0 0.0
        %700 = vmatpush1.msra.mxu0 0.0
        %701 = vmatprep.subr.mxu0 0.0
        %702 = vmatpush1.msra.mxu0 0.0
        %703 = vmatprep.subr.mxu0 0.0
        %704 = vmatpush1.msra.mxu0 0.0
        %705 = vmatprep.subr.mxu0 0.0
        %706 = vmatpush1.msra.mxu0 0.0
        %707 = vmatprep.subr.mxu0 0.0
        %708 = vmatpush1.msra.mxu0 0.0
        %709 = vmatprep.subr.mxu0 0.0
        %710 = vmatpush1.msra.mxu0 0.0
        %711 = vmatprep.subr.mxu0 0.0
        %712 = vmatpush1.msra.mxu0 0.0
        %713 = vmatprep.subr.mxu0 0.0
        %714 = vmatpush1.msra.mxu0 0.0
        %715 = vmatprep.subr.mxu0 0.0
        %716 = vmatpush1.msra.mxu0 0.0
        %717 = vmatprep.subr.mxu0 0.0
        %718 = vmatpush1.msra.mxu0 %v523
        %719 = vmatprep.subr.mxu0 0.0
        %720 = vmatpush2.msra.mxu0 0.0
        %721 = vmatprep.subr.mxu0 0.0
        %722 = vmatpush2.msra.mxu0 0.0
        %723 = vmatprep.subr.mxu0 0.0
        %724 = vmatpush2.msra.mxu0 0.0
        %725 = vmatprep.subr.mxu0 0.0
        %726 = vmatpush2.msra.mxu0 0.0
        %727 = vmatprep.subr.mxu0 0.0
        %728 = vmatpush2.msra.mxu0 0.0
        %729 = vmatprep.subr.mxu0 0.0
        %730 = vmatpush2.msra.mxu0 0.0
        %731 = vmatprep.subr.mxu0 0.0
        %732 = vmatpush2.msra.mxu0 0.0
        %733 = vmatprep.subr.mxu0 0.0
        %734 = vmatpush2.msra.mxu0 0.0
        %735 = vmatprep.subr.mxu0 0.0
        %736 = vmatpush2.msra.mxu0 0.0
        %737 = vmatprep.subr.mxu0 0.0
        %738 = vmatpush2.msra.mxu0 0.0
        %739 = vmatprep.subr.mxu0 0.0
        %740 = vmatpush2.msra.mxu0 0.0
        %741 = vmatprep.subr.mxu0 0.0
        %742 = vmatpush2.msra.mxu0 0.0
        %743 = vmatprep.subr.mxu0 0.0
        %744 = vmatpush2.msra.mxu0 0.0
        %745 = vmatprep.subr.mxu0 0.0
        %746 = vmatpush2.msra.mxu0 0.0
        %747 = vmatprep.subr.mxu0 0.0
        %748 = vmatpush2.msra.mxu0 0.0
        %749 = vmatprep.subr.mxu0 0.0
        %750 = vmatpush2.msra.mxu0 0.0
        %751 = vmatprep.mubr.f32.mxu0 0.0
        %752 = vmatmul.mubr.f32.gmra.mxu0 %v664
        %v753 = vpop.f32.mrf.mxu0
        %v754 = vadd.f32 %v625, %v753
        %v755 = vpop.f32.mrf.mxu0
        %756 = vmatprep.mubr.f32.mxu0 0.0
        %757 = vmatmul.mubr.f32.gmra.mxu0 %v667
        %v758 = vpop.f32.mrf.mxu0
        %v759 = vadd.f32 %v630, %v758
        %v760 = vpop.f32.mrf.mxu0
        %761 = vmatprep.mubr.f32.mxu0 0.0
        %762 = vmatmul.mubr.f32.gmra.mxu0 %v670
        %v763 = vpop.f32.mrf.mxu0
        %v764 = vadd.f32 %v635, %v763
        %v765 = vpop.f32.mrf.mxu0
        %766 = vmatprep.mubr.f32.mxu0 0.0
        %767 = vmatmul.mubr.f32.gmra.mxu0 %v673
        %v768 = vpop.f32.mrf.mxu0
        %v769 = vadd.f32 %v640, %v768
        %v770 = vpop.f32.mrf.mxu0
        %771 = vmatprep.mubr.f32.mxu0 0.0
        %772 = vmatmul.mubr.f32.gmra.mxu0 %v676
        %v773 = vpop.f32.mrf.mxu0
        %v774 = vadd.f32 %v645, %v773
        %v775 = vpop.f32.mrf.mxu0
        %776 = vmatprep.mubr.f32.mxu0 0.0
        %777 = vmatmul.mubr.f32.gmra.mxu0 %v679
        %v778 = vpop.f32.mrf.mxu0
        %v779 = vadd.f32 %v650, %v778
        %v780 = vpop.f32.mrf.mxu0
        %781 = vmatprep.mubr.f32.mxu0 0.0
        %782 = vmatmul.mubr.f32.gmra.mxu0 %v682
        %v783 = vpop.f32.mrf.mxu0
        %v784 = vadd.f32 %v655, %v783
        %v785 = vpop.f32.mrf.mxu0
        %786 = vmatprep.mubr.f32.mxu0 0.0
        %787 = vmatmul.mubr.f32.gmra.mxu0 %v685
        %v788 = vpop.f32.mrf.mxu0
        %v789 = vadd.f32 %v660, %v788
        %v790 = vpop.f32.mrf.mxu0
        %791 = vdwg.mxu0
        %v792 = vld [vmem:[#allocation2 + $0x2] sm:$0xff]
        %v793 = vld [vmem:[#allocation2 + $0x12] sm:$0xff]
        %v794 = vld [vmem:[#allocation2 + $0x22] sm:$0xff]
        %v795 = vld [vmem:[#allocation2 + $0x32] sm:$0xff]
        %v796 = vld [vmem:[#allocation2 + $0x42] sm:$0xff]
        %v797 = vld [vmem:[#allocation2 + $0x52] sm:$0xff]
        %v798 = vld [vmem:[#allocation2 + $0x62] sm:$0xff]
        %v799 = vld [vmem:[#allocation2 + $0x72] sm:$0xff]
        %s800 = scalar_lea.vmem %s2, 16
        %v801 = vld [vmem:[%s800] sm:$0xff]
        %v803 = vsel %vm484, %v792, 0
        %v806 = vsel %vm484, %v793, 0
        %v809 = vsel %vm484, %v794, 0
        %v812 = vsel %vm484, %v795, 0
        %v815 = vsel %vm484, %v796, 0
        %v818 = vsel %vm484, %v797, 0
        %v821 = vsel %vm484, %v798, 0
        %v824 = vsel %vm484, %v799, 0
        %826 = vmatprep.subr.mxu0 0.0
        %827 = vmatpush1.msra.mxu0 0.0
        %828 = vmatprep.subr.mxu0 0.0
        %829 = vmatpush1.msra.mxu0 0.0
        %830 = vmatprep.subr.mxu0 0.0
        %831 = vmatpush1.msra.mxu0 0.0
        %832 = vmatprep.subr.mxu0 0.0
        %833 = vmatpush1.msra.mxu0 0.0
        %834 = vmatprep.subr.mxu0 0.0
        %835 = vmatpush1.msra.mxu0 0.0
        %836 = vmatprep.subr.mxu0 0.0
        %837 = vmatpush1.msra.mxu0 0.0
        %838 = vmatprep.subr.mxu0 0.0
        %839 = vmatpush1.msra.mxu0 0.0
        %840 = vmatprep.subr.mxu0 0.0
        %841 = vmatpush1.msra.mxu0 0.0
        %842 = vmatprep.subr.mxu0 0.0
        %843 = vmatpush1.msra.mxu0 0.0
        %844 = vmatprep.subr.mxu0 0.0
        %845 = vmatpush1.msra.mxu0 0.0
        %846 = vmatprep.subr.mxu0 0.0
        %847 = vmatpush1.msra.mxu0 0.0
        %848 = vmatprep.subr.mxu0 0.0
        %849 = vmatpush1.msra.mxu0 0.0
        %850 = vmatprep.subr.mxu0 0.0
        %851 = vmatpush1.msra.mxu0 0.0
        %852 = vmatprep.subr.mxu0 0.0
        %853 = vmatpush1.msra.mxu0 0.0
        %854 = vmatprep.subr.mxu0 0.0
        %855 = vmatpush1.msra.mxu0 0.0
        %856 = vmatprep.subr.mxu0 0.0
        %857 = vmatpush1.msra.mxu0 %v801
        %858 = vmatprep.subr.mxu0 0.0
        %859 = vmatpush2.msra.mxu0 0.0
        %860 = vmatprep.subr.mxu0 0.0
        %861 = vmatpush2.msra.mxu0 0.0
        %862 = vmatprep.subr.mxu0 0.0
        %863 = vmatpush2.msra.mxu0 0.0
        %864 = vmatprep.subr.mxu0 0.0
        %865 = vmatpush2.msra.mxu0 0.0
        %866 = vmatprep.subr.mxu0 0.0
        %867 = vmatpush2.msra.mxu0 0.0
        %868 = vmatprep.subr.mxu0 0.0
        %869 = vmatpush2.msra.mxu0 0.0
        %870 = vmatprep.subr.mxu0 0.0
        %871 = vmatpush2.msra.mxu0 0.0
        %872 = vmatprep.subr.mxu0 0.0
        %873 = vmatpush2.msra.mxu0 0.0
        %874 = vmatprep.subr.mxu0 0.0
        %875 = vmatpush2.msra.mxu0 0.0
        %876 = vmatprep.subr.mxu0 0.0
        %877 = vmatpush2.msra.mxu0 0.0
        %878 = vmatprep.subr.mxu0 0.0
        %879 = vmatpush2.msra.mxu0 0.0
        %880 = vmatprep.subr.mxu0 0.0
        %881 = vmatpush2.msra.mxu0 0.0
        %882 = vmatprep.subr.mxu0 0.0
        %883 = vmatpush2.msra.mxu0 0.0
        %884 = vmatprep.subr.mxu0 0.0
        %885 = vmatpush2.msra.mxu0 0.0
        %886 = vmatprep.subr.mxu0 0.0
        %887 = vmatpush2.msra.mxu0 0.0
        %888 = vmatprep.subr.mxu0 0.0
        %889 = vmatpush2.msra.mxu0 0.0
        %890 = vmatprep.mubr.f32.mxu0 0.0
        %891 = vmatmul.mubr.f32.gmra.mxu0 %v803
        %v892 = vpop.f32.mrf.mxu0
        %v893 = vadd.f32 0.0, %v892
        %v894 = vpop.f32.mrf.mxu0
        %895 = vmatprep.mubr.f32.mxu0 0.0
        %896 = vmatmul.mubr.f32.gmra.mxu0 %v806
        %v897 = vpop.f32.mrf.mxu0
        %v898 = vadd.f32 0.0, %v897
        %v899 = vpop.f32.mrf.mxu0
        %900 = vmatprep.mubr.f32.mxu0 0.0
        %901 = vmatmul.mubr.f32.gmra.mxu0 %v809
        %v902 = vpop.f32.mrf.mxu0
        %v903 = vadd.f32 0.0, %v902
        %v904 = vpop.f32.mrf.mxu0
        %905 = vmatprep.mubr.f32.mxu0 0.0
        %906 = vmatmul.mubr.f32.gmra.mxu0 %v812
        %v907 = vpop.f32.mrf.mxu0
        %v908 = vadd.f32 0.0, %v907
        %v909 = vpop.f32.mrf.mxu0
        %910 = vmatprep.mubr.f32.mxu0 0.0
        %911 = vmatmul.mubr.f32.gmra.mxu0 %v815
        %v912 = vpop.f32.mrf.mxu0
        %v913 = vadd.f32 0.0, %v912
        %v914 = vpop.f32.mrf.mxu0
        %915 = vmatprep.mubr.f32.mxu0 0.0
        %916 = vmatmul.mubr.f32.gmra.mxu0 %v818
        %v917 = vpop.f32.mrf.mxu0
        %v918 = vadd.f32 0.0, %v917
        %v919 = vpop.f32.mrf.mxu0
        %920 = vmatprep.mubr.f32.mxu0 0.0
        %921 = vmatmul.mubr.f32.gmra.mxu0 %v821
        %v922 = vpop.f32.mrf.mxu0
        %v923 = vadd.f32 0.0, %v922
        %v924 = vpop.f32.mrf.mxu0
        %925 = vmatprep.mubr.f32.mxu0 0.0
        %926 = vmatmul.mubr.f32.gmra.mxu0 %v824
        %v927 = vpop.f32.mrf.mxu0
        %v928 = vadd.f32 0.0, %v927
        %v929 = vpop.f32.mrf.mxu0
        %930 = vdwg.mxu0
        %v931 = vadd.f32 %v754, %v893
        %v932 = vadd.f32 %v759, %v898
        %v933 = vadd.f32 %v764, %v903
        %v934 = vadd.f32 %v769, %v908
        %v935 = vadd.f32 %v774, %v913
        %v936 = vadd.f32 %v779, %v918
        %v937 = vadd.f32 %v784, %v923
        %v938 = vadd.f32 %v789, %v928
        %v939 = vld [vmem:[%s506] sm:$0xff]
        %v940 = vld [vmem:[%s506 + $0x10] sm:$0xff]
        %v941 = vld [vmem:[%s506 + $0x20] sm:$0xff]
        %v942 = vld [vmem:[%s506 + $0x30] sm:$0xff]
        %v943 = vld [vmem:[%s506 + $0x40] sm:$0xff]
        %v944 = vld [vmem:[%s506 + $0x50] sm:$0xff]
        %v945 = vld [vmem:[%s506 + $0x60] sm:$0xff]
        %v946 = vld [vmem:[%s506 + $0x70] sm:$0xff]
        %s947 = scalar_lea.vmem %s2, 24
        %v948 = vld [vmem:[%s947] sm:$0xff]
        %v950 = vsel %vm484, %v939, 0
        %v953 = vsel %vm484, %v940, 0
        %v956 = vsel %vm484, %v941, 0
        %v959 = vsel %vm484, %v942, 0
        %v962 = vsel %vm484, %v943, 0
        %v965 = vsel %vm484, %v944, 0
        %v968 = vsel %vm484, %v945, 0
        %v971 = vsel %vm484, %v946, 0
        %973 = vmatprep.subr.mxu0 0.0
        %974 = vmatpush1.msra.mxu0 0.0
        %975 = vmatprep.subr.mxu0 0.0
        %976 = vmatpush1.msra.mxu0 0.0
        %977 = vmatprep.subr.mxu0 0.0
        %978 = vmatpush1.msra.mxu0 0.0
        %979 = vmatprep.subr.mxu0 0.0
        %980 = vmatpush1.msra.mxu0 0.0
        %981 = vmatprep.subr.mxu0 0.0
        %982 = vmatpush1.msra.mxu0 0.0
        %983 = vmatprep.subr.mxu0 0.0
        %984 = vmatpush1.msra.mxu0 0.0
        %985 = vmatprep.subr.mxu0 0.0
        %986 = vmatpush1.msra.mxu0 0.0
        %987 = vmatprep.subr.mxu0 0.0
        %988 = vmatpush1.msra.mxu0 0.0
        %989 = vmatprep.subr.mxu0 0.0
        %990 = vmatpush1.msra.mxu0 0.0
        %991 = vmatprep.subr.mxu0 0.0
        %992 = vmatpush1.msra.mxu0 0.0
        %993 = vmatprep.subr.mxu0 0.0
        %994 = vmatpush1.msra.mxu0 0.0
        %995 = vmatprep.subr.mxu0 0.0
        %996 = vmatpush1.msra.mxu0 0.0
        %997 = vmatprep.subr.mxu0 0.0
        %998 = vmatpush1.msra.mxu0 0.0
        %999 = vmatprep.subr.mxu0 0.0
        %1000 = vmatpush1.msra.mxu0 0.0
        %1001 = vmatprep.subr.mxu0 0.0
        %1002 = vmatpush1.msra.mxu0 0.0
        %1003 = vmatprep.subr.mxu0 0.0
        %1004 = vmatpush1.msra.mxu0 %v948
        %1005 = vmatprep.subr.mxu0 0.0
        %1006 = vmatpush2.msra.mxu0 0.0
        %1007 = vmatprep.subr.mxu0 0.0
        %1008 = vmatpush2.msra.mxu0 0.0
        %1009 = vmatprep.subr.mxu0 0.0
        %1010 = vmatpush2.msra.mxu0 0.0
        %1011 = vmatprep.subr.mxu0 0.0
        %1012 = vmatpush2.msra.mxu0 0.0
        %1013 = vmatprep.subr.mxu0 0.0
        %1014 = vmatpush2.msra.mxu0 0.0
        %1015 = vmatprep.subr.mxu0 0.0
        %1016 = vmatpush2.msra.mxu0 0.0
        %1017 = vmatprep.subr.mxu0 0.0
        %1018 = vmatpush2.msra.mxu0 0.0
        %1019 = vmatprep.subr.mxu0 0.0
        %1020 = vmatpush2.msra.mxu0 0.0
        %1021 = vmatprep.subr.mxu0 0.0
        %1022 = vmatpush2.msra.mxu0 0.0
        %1023 = vmatprep.subr.mxu0 0.0
        %1024 = vmatpush2.msra.mxu0 0.0
        %1025 = vmatprep.subr.mxu0 0.0
        %1026 = vmatpush2.msra.mxu0 0.0
        %1027 = vmatprep.subr.mxu0 0.0
        %1028 = vmatpush2.msra.mxu0 0.0
        %1029 = vmatprep.subr.mxu0 0.0
        %1030 = vmatpush2.msra.mxu0 0.0
        %1031 = vmatprep.subr.mxu0 0.0
        %1032 = vmatpush2.msra.mxu0 0.0
        %1033 = vmatprep.subr.mxu0 0.0
        %1034 = vmatpush2.msra.mxu0 0.0
        %1035 = vmatprep.subr.mxu0 0.0
        %1036 = vmatpush2.msra.mxu0 0.0
        %1037 = vmatprep.mubr.f32.mxu0 0.0
        %1038 = vmatmul.mubr.f32.gmra.mxu0 %v950
        %v1039 = vpop.f32.mrf.mxu0
        %v1040 = vadd.f32 0.0, %v1039
        %v1041 = vpop.f32.mrf.mxu0
        %1042 = vmatprep.mubr.f32.mxu0 0.0
        %1043 = vmatmul.mubr.f32.gmra.mxu0 %v953
        %v1044 = vpop.f32.mrf.mxu0
        %v1045 = vadd.f32 0.0, %v1044
        %v1046 = vpop.f32.mrf.mxu0
        %1047 = vmatprep.mubr.f32.mxu0 0.0
        %1048 = vmatmul.mubr.f32.gmra.mxu0 %v956
        %v1049 = vpop.f32.mrf.mxu0
        %v1050 = vadd.f32 0.0, %v1049
        %v1051 = vpop.f32.mrf.mxu0
        %1052 = vmatprep.mubr.f32.mxu0 0.0
        %1053 = vmatmul.mubr.f32.gmra.mxu0 %v959
        %v1054 = vpop.f32.mrf.mxu0
        %v1055 = vadd.f32 0.0, %v1054
        %v1056 = vpop.f32.mrf.mxu0
        %1057 = vmatprep.mubr.f32.mxu0 0.0
        %1058 = vmatmul.mubr.f32.gmra.mxu0 %v962
        %v1059 = vpop.f32.mrf.mxu0
        %v1060 = vadd.f32 0.0, %v1059
        %v1061 = vpop.f32.mrf.mxu0
        %1062 = vmatprep.mubr.f32.mxu0 0.0
        %1063 = vmatmul.mubr.f32.gmra.mxu0 %v965
        %v1064 = vpop.f32.mrf.mxu0
        %v1065 = vadd.f32 0.0, %v1064
        %v1066 = vpop.f32.mrf.mxu0
        %1067 = vmatprep.mubr.f32.mxu0 0.0
        %1068 = vmatmul.mubr.f32.gmra.mxu0 %v968
        %v1069 = vpop.f32.mrf.mxu0
        %v1070 = vadd.f32 0.0, %v1069
        %v1071 = vpop.f32.mrf.mxu0
        %1072 = vmatprep.mubr.f32.mxu0 0.0
        %1073 = vmatmul.mubr.f32.gmra.mxu0 %v971
        %v1074 = vpop.f32.mrf.mxu0
        %v1075 = vadd.f32 0.0, %v1074
        %v1076 = vpop.f32.mrf.mxu0
        %1077 = vdwg.mxu0
        %v1078 = vadd.f32 %v931, %v1040
        %v1079 = vadd.f32 %v932, %v1045
        %v1080 = vadd.f32 %v933, %v1050
        %v1081 = vadd.f32 %v934, %v1055
        %v1082 = vadd.f32 %v935, %v1060
        %v1083 = vadd.f32 %v936, %v1065
        %v1084 = vadd.f32 %v937, %v1070
        %v1085 = vadd.f32 %v938, %v1075
        %v1086 = vld [vmem:[%s506 + $0x1] sm:$0xff]
        %v1087 = vld [vmem:[%s506 + $0x11] sm:$0xff]
        %v1088 = vld [vmem:[%s506 + $0x21] sm:$0xff]
        %v1089 = vld [vmem:[%s506 + $0x31] sm:$0xff]
        %v1090 = vld [vmem:[%s506 + $0x41] sm:$0xff]
        %v1091 = vld [vmem:[%s506 + $0x51] sm:$0xff]
        %v1092 = vld [vmem:[%s506 + $0x61] sm:$0xff]
        %v1093 = vld [vmem:[%s506 + $0x71] sm:$0xff]
        %s1094 = scalar_lea.vmem %s2, 32
        %v1095 = vld [vmem:[%s1094] sm:$0xff]
        %v1097 = vsel %vm484, %v1086, 0
        %v1100 = vsel %vm484, %v1087, 0
        %v1103 = vsel %vm484, %v1088, 0
        %v1106 = vsel %vm484, %v1089, 0
        %v1109 = vsel %vm484, %v1090, 0
        %v1112 = vsel %vm484, %v1091, 0
        %v1115 = vsel %vm484, %v1092, 0
        %v1118 = vsel %vm484, %v1093, 0
        %1120 = vmatprep.subr.mxu0 0.0
        %1121 = vmatpush1.msra.mxu0 0.0
        %1122 = vmatprep.subr.mxu0 0.0
        %1123 = vmatpush1.msra.mxu0 0.0
        %1124 = vmatprep.subr.mxu0 0.0
        %1125 = vmatpush1.msra.mxu0 0.0
        %1126 = vmatprep.subr.mxu0 0.0
        %1127 = vmatpush1.msra.mxu0 0.0
        %1128 = vmatprep.subr.mxu0 0.0
        %1129 = vmatpush1.msra.mxu0 0.0
        %1130 = vmatprep.subr.mxu0 0.0
        %1131 = vmatpush1.msra.mxu0 0.0
        %1132 = vmatprep.subr.mxu0 0.0
        %1133 = vmatpush1.msra.mxu0 0.0
        %1134 = vmatprep.subr.mxu0 0.0
        %1135 = vmatpush1.msra.mxu0 0.0
        %1136 = vmatprep.subr.mxu0 0.0
        %1137 = vmatpush1.msra.mxu0 0.0
        %1138 = vmatprep.subr.mxu0 0.0
        %1139 = vmatpush1.msra.mxu0 0.0
        %1140 = vmatprep.subr.mxu0 0.0
        %1141 = vmatpush1.msra.mxu0 0.0
        %1142 = vmatprep.subr.mxu0 0.0
        %1143 = vmatpush1.msra.mxu0 0.0
        %1144 = vmatprep.subr.mxu0 0.0
        %1145 = vmatpush1.msra.mxu0 0.0
        %1146 = vmatprep.subr.mxu0 0.0
        %1147 = vmatpush1.msra.mxu0 0.0
        %1148 = vmatprep.subr.mxu0 0.0
        %1149 = vmatpush1.msra.mxu0 0.0
        %1150 = vmatprep.subr.mxu0 0.0
        %1151 = vmatpush1.msra.mxu0 %v1095
        %1152 = vmatprep.subr.mxu0 0.0
        %1153 = vmatpush2.msra.mxu0 0.0
        %1154 = vmatprep.subr.mxu0 0.0
        %1155 = vmatpush2.msra.mxu0 0.0
        %1156 = vmatprep.subr.mxu0 0.0
        %1157 = vmatpush2.msra.mxu0 0.0
        %1158 = vmatprep.subr.mxu0 0.0
        %1159 = vmatpush2.msra.mxu0 0.0
        %1160 = vmatprep.subr.mxu0 0.0
        %1161 = vmatpush2.msra.mxu0 0.0
        %1162 = vmatprep.subr.mxu0 0.0
        %1163 = vmatpush2.msra.mxu0 0.0
        %1164 = vmatprep.subr.mxu0 0.0
        %1165 = vmatpush2.msra.mxu0 0.0
        %1166 = vmatprep.subr.mxu0 0.0
        %1167 = vmatpush2.msra.mxu0 0.0
        %1168 = vmatprep.subr.mxu0 0.0
        %1169 = vmatpush2.msra.mxu0 0.0
        %1170 = vmatprep.subr.mxu0 0.0
        %1171 = vmatpush2.msra.mxu0 0.0
        %1172 = vmatprep.subr.mxu0 0.0
        %1173 = vmatpush2.msra.mxu0 0.0
        %1174 = vmatprep.subr.mxu0 0.0
        %1175 = vmatpush2.msra.mxu0 0.0
        %1176 = vmatprep.subr.mxu0 0.0
        %1177 = vmatpush2.msra.mxu0 0.0
        %1178 = vmatprep.subr.mxu0 0.0
        %1179 = vmatpush2.msra.mxu0 0.0
        %1180 = vmatprep.subr.mxu0 0.0
        %1181 = vmatpush2.msra.mxu0 0.0
        %1182 = vmatprep.subr.mxu0 0.0
        %1183 = vmatpush2.msra.mxu0 0.0
        %1184 = vmatprep.mubr.f32.mxu0 0.0
        %1185 = vmatmul.mubr.f32.gmra.mxu0 %v1097
        %v1186 = vpop.f32.mrf.mxu0
        %v1187 = vadd.f32 0.0, %v1186
        %v1188 = vpop.f32.mrf.mxu0
        %1189 = vmatprep.mubr.f32.mxu0 0.0
        %1190 = vmatmul.mubr.f32.gmra.mxu0 %v1100
        %v1191 = vpop.f32.mrf.mxu0
        %v1192 = vadd.f32 0.0, %v1191
        %v1193 = vpop.f32.mrf.mxu0
        %1194 = vmatprep.mubr.f32.mxu0 0.0
        %1195 = vmatmul.mubr.f32.gmra.mxu0 %v1103
        %v1196 = vpop.f32.mrf.mxu0
        %v1197 = vadd.f32 0.0, %v1196
        %v1198 = vpop.f32.mrf.mxu0
        %1199 = vmatprep.mubr.f32.mxu0 0.0
        %1200 = vmatmul.mubr.f32.gmra.mxu0 %v1106
        %v1201 = vpop.f32.mrf.mxu0
        %v1202 = vadd.f32 0.0, %v1201
        %v1203 = vpop.f32.mrf.mxu0
        %1204 = vmatprep.mubr.f32.mxu0 0.0
        %1205 = vmatmul.mubr.f32.gmra.mxu0 %v1109
        %v1206 = vpop.f32.mrf.mxu0
        %v1207 = vadd.f32 0.0, %v1206
        %v1208 = vpop.f32.mrf.mxu0
        %1209 = vmatprep.mubr.f32.mxu0 0.0
        %1210 = vmatmul.mubr.f32.gmra.mxu0 %v1112
        %v1211 = vpop.f32.mrf.mxu0
        %v1212 = vadd.f32 0.0, %v1211
        %v1213 = vpop.f32.mrf.mxu0
        %1214 = vmatprep.mubr.f32.mxu0 0.0
        %1215 = vmatmul.mubr.f32.gmra.mxu0 %v1115
        %v1216 = vpop.f32.mrf.mxu0
        %v1217 = vadd.f32 0.0, %v1216
        %v1218 = vpop.f32.mrf.mxu0
        %1219 = vmatprep.mubr.f32.mxu0 0.0
        %1220 = vmatmul.mubr.f32.gmra.mxu0 %v1118
        %v1221 = vpop.f32.mrf.mxu0
        %v1222 = vadd.f32 0.0, %v1221
        %v1223 = vpop.f32.mrf.mxu0
        %1224 = vdwg.mxu0
        %v1225 = vadd.f32 %v1078, %v1187
        %v1226 = vadd.f32 %v1079, %v1192
        %v1227 = vadd.f32 %v1080, %v1197
        %v1228 = vadd.f32 %v1081, %v1202
        %v1229 = vadd.f32 %v1082, %v1207
        %v1230 = vadd.f32 %v1083, %v1212
        %v1231 = vadd.f32 %v1084, %v1217
        %v1232 = vadd.f32 %v1085, %v1222
        %v1233 = vld [vmem:[%s506 + $0x2] sm:$0xff]
        %v1234 = vld [vmem:[%s506 + $0x12] sm:$0xff]
        %v1235 = vld [vmem:[%s506 + $0x22] sm:$0xff]
        %v1236 = vld [vmem:[%s506 + $0x32] sm:$0xff]
        %v1237 = vld [vmem:[%s506 + $0x42] sm:$0xff]
        %v1238 = vld [vmem:[%s506 + $0x52] sm:$0xff]
        %v1239 = vld [vmem:[%s506 + $0x62] sm:$0xff]
        %v1240 = vld [vmem:[%s506 + $0x72] sm:$0xff]
        %s1241 = scalar_lea.vmem %s2, 40
        %v1242 = vld [vmem:[%s1241] sm:$0xff]
        %v1244 = vsel %vm484, %v1233, 0
        %v1247 = vsel %vm484, %v1234, 0
        %v1250 = vsel %vm484, %v1235, 0
        %v1253 = vsel %vm484, %v1236, 0
        %v1256 = vsel %vm484, %v1237, 0
        %v1259 = vsel %vm484, %v1238, 0
        %v1262 = vsel %vm484, %v1239, 0
        %v1265 = vsel %vm484, %v1240, 0
        %1267 = vmatprep.subr.mxu0 0.0
        %1268 = vmatpush1.msra.mxu0 0.0
        %1269 = vmatprep.subr.mxu0 0.0
        %1270 = vmatpush1.msra.mxu0 0.0
        %1271 = vmatprep.subr.mxu0 0.0
        %1272 = vmatpush1.msra.mxu0 0.0
        %1273 = vmatprep.subr.mxu0 0.0
        %1274 = vmatpush1.msra.mxu0 0.0
        %1275 = vmatprep.subr.mxu0 0.0
        %1276 = vmatpush1.msra.mxu0 0.0
        %1277 = vmatprep.subr.mxu0 0.0
        %1278 = vmatpush1.msra.mxu0 0.0
        %1279 = vmatprep.subr.mxu0 0.0
        %1280 = vmatpush1.msra.mxu0 0.0
        %1281 = vmatprep.subr.mxu0 0.0
        %1282 = vmatpush1.msra.mxu0 0.0
        %1283 = vmatprep.subr.mxu0 0.0
        %1284 = vmatpush1.msra.mxu0 0.0
        %1285 = vmatprep.subr.mxu0 0.0
        %1286 = vmatpush1.msra.mxu0 0.0
        %1287 = vmatprep.subr.mxu0 0.0
        %1288 = vmatpush1.msra.mxu0 0.0
        %1289 = vmatprep.subr.mxu0 0.0
        %1290 = vmatpush1.msra.mxu0 0.0
        %1291 = vmatprep.subr.mxu0 0.0
        %1292 = vmatpush1.msra.mxu0 0.0
        %1293 = vmatprep.subr.mxu0 0.0
        %1294 = vmatpush1.msra.mxu0 0.0
        %1295 = vmatprep.subr.mxu0 0.0
        %1296 = vmatpush1.msra.mxu0 0.0
        %1297 = vmatprep.subr.mxu0 0.0
        %1298 = vmatpush1.msra.mxu0 %v1242
        %1299 = vmatprep.subr.mxu0 0.0
        %1300 = vmatpush2.msra.mxu0 0.0
        %1301 = vmatprep.subr.mxu0 0.0
        %1302 = vmatpush2.msra.mxu0 0.0
        %1303 = vmatprep.subr.mxu0 0.0
        %1304 = vmatpush2.msra.mxu0 0.0
        %1305 = vmatprep.subr.mxu0 0.0
        %1306 = vmatpush2.msra.mxu0 0.0
        %1307 = vmatprep.subr.mxu0 0.0
        %1308 = vmatpush2.msra.mxu0 0.0
        %1309 = vmatprep.subr.mxu0 0.0
        %1310 = vmatpush2.msra.mxu0 0.0
        %1311 = vmatprep.subr.mxu0 0.0
        %1312 = vmatpush2.msra.mxu0 0.0
        %1313 = vmatprep.subr.mxu0 0.0
        %1314 = vmatpush2.msra.mxu0 0.0
        %1315 = vmatprep.subr.mxu0 0.0
        %1316 = vmatpush2.msra.mxu0 0.0
        %1317 = vmatprep.subr.mxu0 0.0
        %1318 = vmatpush2.msra.mxu0 0.0
        %1319 = vmatprep.subr.mxu0 0.0
        %1320 = vmatpush2.msra.mxu0 0.0
        %1321 = vmatprep.subr.mxu0 0.0
        %1322 = vmatpush2.msra.mxu0 0.0
        %1323 = vmatprep.subr.mxu0 0.0
        %1324 = vmatpush2.msra.mxu0 0.0
        %1325 = vmatprep.subr.mxu0 0.0
        %1326 = vmatpush2.msra.mxu0 0.0
        %1327 = vmatprep.subr.mxu0 0.0
        %1328 = vmatpush2.msra.mxu0 0.0
        %1329 = vmatprep.subr.mxu0 0.0
        %1330 = vmatpush2.msra.mxu0 0.0
        %1331 = vmatprep.mubr.f32.mxu0 0.0
        %1332 = vmatmul.mubr.f32.gmra.mxu0 %v1244
        %v1333 = vpop.f32.mrf.mxu0
        %v1334 = vadd.f32 0.0, %v1333
        %v1335 = vpop.f32.mrf.mxu0
        %1336 = vmatprep.mubr.f32.mxu0 0.0
        %1337 = vmatmul.mubr.f32.gmra.mxu0 %v1247
        %v1338 = vpop.f32.mrf.mxu0
        %v1339 = vadd.f32 0.0, %v1338
        %v1340 = vpop.f32.mrf.mxu0
        %1341 = vmatprep.mubr.f32.mxu0 0.0
        %1342 = vmatmul.mubr.f32.gmra.mxu0 %v1250
        %v1343 = vpop.f32.mrf.mxu0
        %v1344 = vadd.f32 0.0, %v1343
        %v1345 = vpop.f32.mrf.mxu0
        %1346 = vmatprep.mubr.f32.mxu0 0.0
        %1347 = vmatmul.mubr.f32.gmra.mxu0 %v1253
        %v1348 = vpop.f32.mrf.mxu0
        %v1349 = vadd.f32 0.0, %v1348
        %v1350 = vpop.f32.mrf.mxu0
        %1351 = vmatprep.mubr.f32.mxu0 0.0
        %1352 = vmatmul.mubr.f32.gmra.mxu0 %v1256
        %v1353 = vpop.f32.mrf.mxu0
        %v1354 = vadd.f32 0.0, %v1353
        %v1355 = vpop.f32.mrf.mxu0
        %1356 = vmatprep.mubr.f32.mxu0 0.0
        %1357 = vmatmul.mubr.f32.gmra.mxu0 %v1259
        %v1358 = vpop.f32.mrf.mxu0
        %v1359 = vadd.f32 0.0, %v1358
        %v1360 = vpop.f32.mrf.mxu0
        %1361 = vmatprep.mubr.f32.mxu0 0.0
        %1362 = vmatmul.mubr.f32.gmra.mxu0 %v1262
        %v1363 = vpop.f32.mrf.mxu0
        %v1364 = vadd.f32 0.0, %v1363
        %v1365 = vpop.f32.mrf.mxu0
        %1366 = vmatprep.mubr.f32.mxu0 0.0
        %1367 = vmatmul.mubr.f32.gmra.mxu0 %v1265
        %v1368 = vpop.f32.mrf.mxu0
        %v1369 = vadd.f32 0.0, %v1368
        %v1370 = vpop.f32.mrf.mxu0
        %1371 = vdwg.mxu0
        %v1372 = vadd.f32 %v1225, %v1334
        %v1373 = vadd.f32 %v1226, %v1339
        %v1374 = vadd.f32 %v1227, %v1344
        %v1375 = vadd.f32 %v1228, %v1349
        %v1376 = vadd.f32 %v1229, %v1354
        %v1377 = vadd.f32 %v1230, %v1359
        %v1378 = vadd.f32 %v1231, %v1364
        %v1379 = vadd.f32 %v1232, %v1369
        %s1380 = scalar_lea.vmem [#allocation2], 32
        %v1381 = vld [vmem:[%s1380] sm:$0xff]
        %v1382 = vld [vmem:[%s1380 + $0x10] sm:$0xff]
        %v1383 = vld [vmem:[%s1380 + $0x20] sm:$0xff]
        %v1384 = vld [vmem:[%s1380 + $0x30] sm:$0xff]
        %v1385 = vld [vmem:[%s1380 + $0x40] sm:$0xff]
        %v1386 = vld [vmem:[%s1380 + $0x50] sm:$0xff]
        %v1387 = vld [vmem:[%s1380 + $0x60] sm:$0xff]
        %v1388 = vld [vmem:[%s1380 + $0x70] sm:$0xff]
        %s1389 = scalar_lea.vmem %s2, 48
        %v1390 = vld [vmem:[%s1389] sm:$0xff]
        %v1392 = vsel %vm484, %v1381, 0
        %v1395 = vsel %vm484, %v1382, 0
        %v1398 = vsel %vm484, %v1383, 0
        %v1401 = vsel %vm484, %v1384, 0
        %v1404 = vsel %vm484, %v1385, 0
        %v1407 = vsel %vm484, %v1386, 0
        %v1410 = vsel %vm484, %v1387, 0
        %v1413 = vsel %vm484, %v1388, 0
        %1415 = vmatprep.subr.mxu0 0.0
        %1416 = vmatpush1.msra.mxu0 0.0
        %1417 = vmatprep.subr.mxu0 0.0
        %1418 = vmatpush1.msra.mxu0 0.0
        %1419 = vmatprep.subr.mxu0 0.0
        %1420 = vmatpush1.msra.mxu0 0.0
        %1421 = vmatprep.subr.mxu0 0.0
        %1422 = vmatpush1.msra.mxu0 0.0
        %1423 = vmatprep.subr.mxu0 0.0
        %1424 = vmatpush1.msra.mxu0 0.0
        %1425 = vmatprep.subr.mxu0 0.0
        %1426 = vmatpush1.msra.mxu0 0.0
        %1427 = vmatprep.subr.mxu0 0.0
        %1428 = vmatpush1.msra.mxu0 0.0
        %1429 = vmatprep.subr.mxu0 0.0
        %1430 = vmatpush1.msra.mxu0 0.0
        %1431 = vmatprep.subr.mxu0 0.0
        %1432 = vmatpush1.msra.mxu0 0.0
        %1433 = vmatprep.subr.mxu0 0.0
        %1434 = vmatpush1.msra.mxu0 0.0
        %1435 = vmatprep.subr.mxu0 0.0
        %1436 = vmatpush1.msra.mxu0 0.0
        %1437 = vmatprep.subr.mxu0 0.0
        %1438 = vmatpush1.msra.mxu0 0.0
        %1439 = vmatprep.subr.mxu0 0.0
        %1440 = vmatpush1.msra.mxu0 0.0
        %1441 = vmatprep.subr.mxu0 0.0
        %1442 = vmatpush1.msra.mxu0 0.0
        %1443 = vmatprep.subr.mxu0 0.0
        %1444 = vmatpush1.msra.mxu0 0.0
        %1445 = vmatprep.subr.mxu0 0.0
        %1446 = vmatpush1.msra.mxu0 %v1390
        %1447 = vmatprep.subr.mxu0 0.0
        %1448 = vmatpush2.msra.mxu0 0.0
        %1449 = vmatprep.subr.mxu0 0.0
        %1450 = vmatpush2.msra.mxu0 0.0
        %1451 = vmatprep.subr.mxu0 0.0
        %1452 = vmatpush2.msra.mxu0 0.0
        %1453 = vmatprep.subr.mxu0 0.0
        %1454 = vmatpush2.msra.mxu0 0.0
        %1455 = vmatprep.subr.mxu0 0.0
        %1456 = vmatpush2.msra.mxu0 0.0
        %1457 = vmatprep.subr.mxu0 0.0
        %1458 = vmatpush2.msra.mxu0 0.0
        %1459 = vmatprep.subr.mxu0 0.0
        %1460 = vmatpush2.msra.mxu0 0.0
        %1461 = vmatprep.subr.mxu0 0.0
        %1462 = vmatpush2.msra.mxu0 0.0
        %1463 = vmatprep.subr.mxu0 0.0
        %1464 = vmatpush2.msra.mxu0 0.0
        %1465 = vmatprep.subr.mxu0 0.0
        %1466 = vmatpush2.msra.mxu0 0.0
        %1467 = vmatprep.subr.mxu0 0.0
        %1468 = vmatpush2.msra.mxu0 0.0
        %1469 = vmatprep.subr.mxu0 0.0
        %1470 = vmatpush2.msra.mxu0 0.0
        %1471 = vmatprep.subr.mxu0 0.0
        %1472 = vmatpush2.msra.mxu0 0.0
        %1473 = vmatprep.subr.mxu0 0.0
        %1474 = vmatpush2.msra.mxu0 0.0
        %1475 = vmatprep.subr.mxu0 0.0
        %1476 = vmatpush2.msra.mxu0 0.0
        %1477 = vmatprep.subr.mxu0 0.0
        %1478 = vmatpush2.msra.mxu0 0.0
        %1479 = vmatprep.mubr.f32.mxu0 0.0
        %1480 = vmatmul.mubr.f32.gmra.mxu0 %v1392
        %v1481 = vpop.f32.mrf.mxu0
        %v1482 = vadd.f32 0.0, %v1481
        %v1483 = vpop.f32.mrf.mxu0
        %1484 = vmatprep.mubr.f32.mxu0 0.0
        %1485 = vmatmul.mubr.f32.gmra.mxu0 %v1395
        %v1486 = vpop.f32.mrf.mxu0
        %v1487 = vadd.f32 0.0, %v1486
        %v1488 = vpop.f32.mrf.mxu0
        %1489 = vmatprep.mubr.f32.mxu0 0.0
        %1490 = vmatmul.mubr.f32.gmra.mxu0 %v1398
        %v1491 = vpop.f32.mrf.mxu0
        %v1492 = vadd.f32 0.0, %v1491
        %v1493 = vpop.f32.mrf.mxu0
        %1494 = vmatprep.mubr.f32.mxu0 0.0
        %1495 = vmatmul.mubr.f32.gmra.mxu0 %v1401
        %v1496 = vpop.f32.mrf.mxu0
        %v1497 = vadd.f32 0.0, %v1496
        %v1498 = vpop.f32.mrf.mxu0
        %1499 = vmatprep.mubr.f32.mxu0 0.0
        %1500 = vmatmul.mubr.f32.gmra.mxu0 %v1404
        %v1501 = vpop.f32.mrf.mxu0
        %v1502 = vadd.f32 0.0, %v1501
        %v1503 = vpop.f32.mrf.mxu0
        %1504 = vmatprep.mubr.f32.mxu0 0.0
        %1505 = vmatmul.mubr.f32.gmra.mxu0 %v1407
        %v1506 = vpop.f32.mrf.mxu0
        %v1507 = vadd.f32 0.0, %v1506
        %v1508 = vpop.f32.mrf.mxu0
        %1509 = vmatprep.mubr.f32.mxu0 0.0
        %1510 = vmatmul.mubr.f32.gmra.mxu0 %v1410
        %v1511 = vpop.f32.mrf.mxu0
        %v1512 = vadd.f32 0.0, %v1511
        %v1513 = vpop.f32.mrf.mxu0
        %1514 = vmatprep.mubr.f32.mxu0 0.0
        %1515 = vmatmul.mubr.f32.gmra.mxu0 %v1413
        %v1516 = vpop.f32.mrf.mxu0
        %v1517 = vadd.f32 0.0, %v1516
        %v1518 = vpop.f32.mrf.mxu0
        %1519 = vdwg.mxu0
        %v1520 = vadd.f32 %v1372, %v1482
        %v1521 = vadd.f32 %v1373, %v1487
        %v1522 = vadd.f32 %v1374, %v1492
        %v1523 = vadd.f32 %v1375, %v1497
        %v1524 = vadd.f32 %v1376, %v1502
        %v1525 = vadd.f32 %v1377, %v1507
        %v1526 = vadd.f32 %v1378, %v1512
        %v1527 = vadd.f32 %v1379, %v1517
        %v1528 = vld [vmem:[%s1380 + $0x1] sm:$0xff]
        %v1529 = vld [vmem:[%s1380 + $0x11] sm:$0xff]
        %v1530 = vld [vmem:[%s1380 + $0x21] sm:$0xff]
        %v1531 = vld [vmem:[%s1380 + $0x31] sm:$0xff]
        %v1532 = vld [vmem:[%s1380 + $0x41] sm:$0xff]
        %v1533 = vld [vmem:[%s1380 + $0x51] sm:$0xff]
        %v1534 = vld [vmem:[%s1380 + $0x61] sm:$0xff]
        %v1535 = vld [vmem:[%s1380 + $0x71] sm:$0xff]
        %s1536 = scalar_lea.vmem %s2, 56
        %v1537 = vld [vmem:[%s1536] sm:$0xff]
        %v1539 = vsel %vm484, %v1528, 0
        %v1542 = vsel %vm484, %v1529, 0
        %v1545 = vsel %vm484, %v1530, 0
        %v1548 = vsel %vm484, %v1531, 0
        %v1551 = vsel %vm484, %v1532, 0
        %v1554 = vsel %vm484, %v1533, 0
        %v1557 = vsel %vm484, %v1534, 0
        %v1560 = vsel %vm484, %v1535, 0
        %1562 = vmatprep.subr.mxu0 0.0
        %1563 = vmatpush1.msra.mxu0 0.0
        %1564 = vmatprep.subr.mxu0 0.0
        %1565 = vmatpush1.msra.mxu0 0.0
        %1566 = vmatprep.subr.mxu0 0.0
        %1567 = vmatpush1.msra.mxu0 0.0
        %1568 = vmatprep.subr.mxu0 0.0
        %1569 = vmatpush1.msra.mxu0 0.0
        %1570 = vmatprep.subr.mxu0 0.0
        %1571 = vmatpush1.msra.mxu0 0.0
        %1572 = vmatprep.subr.mxu0 0.0
        %1573 = vmatpush1.msra.mxu0 0.0
        %1574 = vmatprep.subr.mxu0 0.0
        %1575 = vmatpush1.msra.mxu0 0.0
        %1576 = vmatprep.subr.mxu0 0.0
        %1577 = vmatpush1.msra.mxu0 0.0
        %1578 = vmatprep.subr.mxu0 0.0
        %1579 = vmatpush1.msra.mxu0 0.0
        %1580 = vmatprep.subr.mxu0 0.0
        %1581 = vmatpush1.msra.mxu0 0.0
        %1582 = vmatprep.subr.mxu0 0.0
        %1583 = vmatpush1.msra.mxu0 0.0
        %1584 = vmatprep.subr.mxu0 0.0
        %1585 = vmatpush1.msra.mxu0 0.0
        %1586 = vmatprep.subr.mxu0 0.0
        %1587 = vmatpush1.msra.mxu0 0.0
        %1588 = vmatprep.subr.mxu0 0.0
        %1589 = vmatpush1.msra.mxu0 0.0
        %1590 = vmatprep.subr.mxu0 0.0
        %1591 = vmatpush1.msra.mxu0 0.0
        %1592 = vmatprep.subr.mxu0 0.0
        %1593 = vmatpush1.msra.mxu0 %v1537
        %1594 = vmatprep.subr.mxu0 0.0
        %1595 = vmatpush2.msra.mxu0 0.0
        %1596 = vmatprep.subr.mxu0 0.0
        %1597 = vmatpush2.msra.mxu0 0.0
        %1598 = vmatprep.subr.mxu0 0.0
        %1599 = vmatpush2.msra.mxu0 0.0
        %1600 = vmatprep.subr.mxu0 0.0
        %1601 = vmatpush2.msra.mxu0 0.0
        %1602 = vmatprep.subr.mxu0 0.0
        %1603 = vmatpush2.msra.mxu0 0.0
        %1604 = vmatprep.subr.mxu0 0.0
        %1605 = vmatpush2.msra.mxu0 0.0
        %1606 = vmatprep.subr.mxu0 0.0
        %1607 = vmatpush2.msra.mxu0 0.0
        %1608 = vmatprep.subr.mxu0 0.0
        %1609 = vmatpush2.msra.mxu0 0.0
        %1610 = vmatprep.subr.mxu0 0.0
        %1611 = vmatpush2.msra.mxu0 0.0
        %1612 = vmatprep.subr.mxu0 0.0
        %1613 = vmatpush2.msra.mxu0 0.0
        %1614 = vmatprep.subr.mxu0 0.0
        %1615 = vmatpush2.msra.mxu0 0.0
        %1616 = vmatprep.subr.mxu0 0.0
        %1617 = vmatpush2.msra.mxu0 0.0
        %1618 = vmatprep.subr.mxu0 0.0
        %1619 = vmatpush2.msra.mxu0 0.0
        %1620 = vmatprep.subr.mxu0 0.0
        %1621 = vmatpush2.msra.mxu0 0.0
        %1622 = vmatprep.subr.mxu0 0.0
        %1623 = vmatpush2.msra.mxu0 0.0
        %1624 = vmatprep.subr.mxu0 0.0
        %1625 = vmatpush2.msra.mxu0 0.0
        %1626 = vmatprep.mubr.f32.mxu0 0.0
        %1627 = vmatmul.mubr.f32.gmra.mxu0 %v1539
        %v1628 = vpop.f32.mrf.mxu0
        %v1629 = vadd.f32 0.0, %v1628
        %v1630 = vpop.f32.mrf.mxu0
        %1631 = vmatprep.mubr.f32.mxu0 0.0
        %1632 = vmatmul.mubr.f32.gmra.mxu0 %v1542
        %v1633 = vpop.f32.mrf.mxu0
        %v1634 = vadd.f32 0.0, %v1633
        %v1635 = vpop.f32.mrf.mxu0
        %1636 = vmatprep.mubr.f32.mxu0 0.0
        %1637 = vmatmul.mubr.f32.gmra.mxu0 %v1545
        %v1638 = vpop.f32.mrf.mxu0
        %v1639 = vadd.f32 0.0, %v1638
        %v1640 = vpop.f32.mrf.mxu0
        %1641 = vmatprep.mubr.f32.mxu0 0.0
        %1642 = vmatmul.mubr.f32.gmra.mxu0 %v1548
        %v1643 = vpop.f32.mrf.mxu0
        %v1644 = vadd.f32 0.0, %v1643
        %v1645 = vpop.f32.mrf.mxu0
        %1646 = vmatprep.mubr.f32.mxu0 0.0
        %1647 = vmatmul.mubr.f32.gmra.mxu0 %v1551
        %v1648 = vpop.f32.mrf.mxu0
        %v1649 = vadd.f32 0.0, %v1648
        %v1650 = vpop.f32.mrf.mxu0
        %1651 = vmatprep.mubr.f32.mxu0 0.0
        %1652 = vmatmul.mubr.f32.gmra.mxu0 %v1554
        %v1653 = vpop.f32.mrf.mxu0
        %v1654 = vadd.f32 0.0, %v1653
        %v1655 = vpop.f32.mrf.mxu0
        %1656 = vmatprep.mubr.f32.mxu0 0.0
        %1657 = vmatmul.mubr.f32.gmra.mxu0 %v1557
        %v1658 = vpop.f32.mrf.mxu0
        %v1659 = vadd.f32 0.0, %v1658
        %v1660 = vpop.f32.mrf.mxu0
        %1661 = vmatprep.mubr.f32.mxu0 0.0
        %1662 = vmatmul.mubr.f32.gmra.mxu0 %v1560
        %v1663 = vpop.f32.mrf.mxu0
        %v1664 = vadd.f32 0.0, %v1663
        %v1665 = vpop.f32.mrf.mxu0
        %1666 = vdwg.mxu0
        %v1667 = vadd.f32 %v1520, %v1629
        %v1668 = vadd.f32 %v1521, %v1634
        %v1669 = vadd.f32 %v1522, %v1639
        %v1670 = vadd.f32 %v1523, %v1644
        %v1671 = vadd.f32 %v1524, %v1649
        %v1672 = vadd.f32 %v1525, %v1654
        %v1673 = vadd.f32 %v1526, %v1659
        %v1674 = vadd.f32 %v1527, %v1664
        %v1675 = vld [vmem:[%s1380 + $0x2] sm:$0xff]
        %v1676 = vld [vmem:[%s1380 + $0x12] sm:$0xff]
        %v1677 = vld [vmem:[%s1380 + $0x22] sm:$0xff]
        %v1678 = vld [vmem:[%s1380 + $0x32] sm:$0xff]
        %v1679 = vld [vmem:[%s1380 + $0x42] sm:$0xff]
        %v1680 = vld [vmem:[%s1380 + $0x52] sm:$0xff]
        %v1681 = vld [vmem:[%s1380 + $0x62] sm:$0xff]
        %v1682 = vld [vmem:[%s1380 + $0x72] sm:$0xff]
        %s1683 = scalar_lea.vmem %s2, 64
        %v1684 = vld [vmem:[%s1683] sm:$0xff]
        %v1686 = vsel %vm484, %v1675, 0
        %v1689 = vsel %vm484, %v1676, 0
        %v1692 = vsel %vm484, %v1677, 0
        %v1695 = vsel %vm484, %v1678, 0
        %v1698 = vsel %vm484, %v1679, 0
        %v1701 = vsel %vm484, %v1680, 0
        %v1704 = vsel %vm484, %v1681, 0
        %v1707 = vsel %vm484, %v1682, 0
        %1709 = vmatprep.subr.mxu0 0.0
        %1710 = vmatpush1.msra.mxu0 0.0
        %1711 = vmatprep.subr.mxu0 0.0
        %1712 = vmatpush1.msra.mxu0 0.0
        %1713 = vmatprep.subr.mxu0 0.0
        %1714 = vmatpush1.msra.mxu0 0.0
        %1715 = vmatprep.subr.mxu0 0.0
        %1716 = vmatpush1.msra.mxu0 0.0
        %1717 = vmatprep.subr.mxu0 0.0
        %1718 = vmatpush1.msra.mxu0 0.0
        %1719 = vmatprep.subr.mxu0 0.0
        %1720 = vmatpush1.msra.mxu0 0.0
        %1721 = vmatprep.subr.mxu0 0.0
        %1722 = vmatpush1.msra.mxu0 0.0
        %1723 = vmatprep.subr.mxu0 0.0
        %1724 = vmatpush1.msra.mxu0 0.0
        %1725 = vmatprep.subr.mxu0 0.0
        %1726 = vmatpush1.msra.mxu0 0.0
        %1727 = vmatprep.subr.mxu0 0.0
        %1728 = vmatpush1.msra.mxu0 0.0
        %1729 = vmatprep.subr.mxu0 0.0
        %1730 = vmatpush1.msra.mxu0 0.0
        %1731 = vmatprep.subr.mxu0 0.0
        %1732 = vmatpush1.msra.mxu0 0.0
        %1733 = vmatprep.subr.mxu0 0.0
        %1734 = vmatpush1.msra.mxu0 0.0
        %1735 = vmatprep.subr.mxu0 0.0
        %1736 = vmatpush1.msra.mxu0 0.0
        %1737 = vmatprep.subr.mxu0 0.0
        %1738 = vmatpush1.msra.mxu0 0.0
        %1739 = vmatprep.subr.mxu0 0.0
        %1740 = vmatpush1.msra.mxu0 %v1684
        %1741 = vmatprep.subr.mxu0 0.0
        %1742 = vmatpush2.msra.mxu0 0.0
        %1743 = vmatprep.subr.mxu0 0.0
        %1744 = vmatpush2.msra.mxu0 0.0
        %1745 = vmatprep.subr.mxu0 0.0
        %1746 = vmatpush2.msra.mxu0 0.0
        %1747 = vmatprep.subr.mxu0 0.0
        %1748 = vmatpush2.msra.mxu0 0.0
        %1749 = vmatprep.subr.mxu0 0.0
        %1750 = vmatpush2.msra.mxu0 0.0
        %1751 = vmatprep.subr.mxu0 0.0
        %1752 = vmatpush2.msra.mxu0 0.0
        %1753 = vmatprep.subr.mxu0 0.0
        %1754 = vmatpush2.msra.mxu0 0.0
        %1755 = vmatprep.subr.mxu0 0.0
        %1756 = vmatpush2.msra.mxu0 0.0
        %1757 = vmatprep.subr.mxu0 0.0
        %1758 = vmatpush2.msra.mxu0 0.0
        %1759 = vmatprep.subr.mxu0 0.0
        %1760 = vmatpush2.msra.mxu0 0.0
        %1761 = vmatprep.subr.mxu0 0.0
        %1762 = vmatpush2.msra.mxu0 0.0
        %1763 = vmatprep.subr.mxu0 0.0
        %1764 = vmatpush2.msra.mxu0 0.0
        %1765 = vmatprep.subr.mxu0 0.0
        %1766 = vmatpush2.msra.mxu0 0.0
        %1767 = vmatprep.subr.mxu0 0.0
        %1768 = vmatpush2.msra.mxu0 0.0
        %1769 = vmatprep.subr.mxu0 0.0
        %1770 = vmatpush2.msra.mxu0 0.0
        %1771 = vmatprep.subr.mxu0 0.0
        %1772 = vmatpush2.msra.mxu0 0.0
        %1773 = vmatprep.mubr.f32.mxu0 0.0
        %1774 = vmatmul.mubr.f32.gmra.mxu0 %v1686
        %v1775 = vpop.f32.mrf.mxu0
        %v1776 = vadd.f32 0.0, %v1775
        %v1777 = vpop.f32.mrf.mxu0
        %1778 = vmatprep.mubr.f32.mxu0 0.0
        %1779 = vmatmul.mubr.f32.gmra.mxu0 %v1689
        %v1780 = vpop.f32.mrf.mxu0
        %v1781 = vadd.f32 0.0, %v1780
        %v1782 = vpop.f32.mrf.mxu0
        %1783 = vmatprep.mubr.f32.mxu0 0.0
        %1784 = vmatmul.mubr.f32.gmra.mxu0 %v1692
        %v1785 = vpop.f32.mrf.mxu0
        %v1786 = vadd.f32 0.0, %v1785
        %v1787 = vpop.f32.mrf.mxu0
        %1788 = vmatprep.mubr.f32.mxu0 0.0
        %1789 = vmatmul.mubr.f32.gmra.mxu0 %v1695
        %v1790 = vpop.f32.mrf.mxu0
        %v1791 = vadd.f32 0.0, %v1790
        %v1792 = vpop.f32.mrf.mxu0
        %1793 = vmatprep.mubr.f32.mxu0 0.0
        %1794 = vmatmul.mubr.f32.gmra.mxu0 %v1698
        %v1795 = vpop.f32.mrf.mxu0
        %v1796 = vadd.f32 0.0, %v1795
        %v1797 = vpop.f32.mrf.mxu0
        %1798 = vmatprep.mubr.f32.mxu0 0.0
        %1799 = vmatmul.mubr.f32.gmra.mxu0 %v1701
        %v1800 = vpop.f32.mrf.mxu0
        %v1801 = vadd.f32 0.0, %v1800
        %v1802 = vpop.f32.mrf.mxu0
        %1803 = vmatprep.mubr.f32.mxu0 0.0
        %1804 = vmatmul.mubr.f32.gmra.mxu0 %v1704
        %v1805 = vpop.f32.mrf.mxu0
        %v1806 = vadd.f32 0.0, %v1805
        %v1807 = vpop.f32.mrf.mxu0
        %1808 = vmatprep.mubr.f32.mxu0 0.0
        %1809 = vmatmul.mubr.f32.gmra.mxu0 %v1707
        %v1810 = vpop.f32.mrf.mxu0
        %v1811 = vadd.f32 0.0, %v1810
        %v1812 = vpop.f32.mrf.mxu0
        %1813 = vdwg.mxu0
        %v1814 = vadd.f32 %v1667, %v1776
        %v1815 = vadd.f32 %v1668, %v1781
        %v1816 = vadd.f32 %v1669, %v1786
        %v1817 = vadd.f32 %v1670, %v1791
        %v1818 = vadd.f32 %v1671, %v1796
        %v1819 = vadd.f32 %v1672, %v1801
        %v1820 = vadd.f32 %v1673, %v1806
        %v1821 = vadd.f32 %v1674, %v1811
        %v1822 = vld [vmem:[%s6] sm:$0x1]
        %v1824 = vlaneseq
        %v1825 = vshrl.u32 %v1824, 7
        %v1826 = vsub.s32 0, %v1825
        %v1827 = vrot.slane %v1822, %v1826
        %v1829 = vmul.f32 %v1814, %v1827
        %v1830 = vmul.f32 %v1815, %v1827
        %v1831 = vmul.f32 %v1816, %v1827
        %v1832 = vmul.f32 %v1817, %v1827
        %v1833 = vmul.f32 %v1818, %v1827
        %v1834 = vmul.f32 %v1819, %v1827
        %v1835 = vmul.f32 %v1820, %v1827
        %v1836 = vmul.f32 %v1821, %v1827
        %v1837 = vld [vmem:[%s7] sm:$0x1]
        %v1839 = vlaneseq
        %v1840 = vshrl.u32 %v1839, 7
        %v1841 = vsub.s32 0, %v1840
        %v1842 = vrot.slane %v1837, %v1841
        %v1844 = vadd.f32 %v1829, %v1842
        %v1845 = vadd.f32 %v1830, %v1842
        %v1846 = vadd.f32 %v1831, %v1842
        %v1847 = vadd.f32 %v1832, %v1842
        %v1848 = vadd.f32 %v1833, %v1842
        %v1849 = vadd.f32 %v1834, %v1842
        %v1850 = vadd.f32 %v1835, %v1842
        %v1851 = vadd.f32 %v1836, %v1842
        %v1852 = vmax.f32 %v1844, 0.0
        %v1853 = vmax.f32 %v1845, 0.0
        %v1854 = vmax.f32 %v1846, 0.0
        %v1855 = vmax.f32 %v1847, 0.0
        %v1856 = vmax.f32 %v1848, 0.0
        %v1857 = vmax.f32 %v1849, 0.0
        %v1858 = vmax.f32 %v1850, 0.0
        %v1859 = vmax.f32 %v1851, 0.0
        %v1860 = vld [vmem:[%s3] sm:$0xff]
        %v1861 = vld [vmem:[%s3 + $0x8] sm:$0xff]
        %v1862 = vld [vmem:[%s3 + $0x10] sm:$0xff]
        %v1863 = vld [vmem:[%s3 + $0x18] sm:$0xff]
        %v1865 = vsel %vm484, %v1860, 0
        %v1868 = vsel %vm484, %v1861, 0
        %v1871 = vsel %vm484, %v1862, 0
        %v1874 = vsel %vm484, %v1863, 0
        %v1877 = vsel %vm484, %v1852, 0
        %v1880 = vsel %vm484, %v1853, 0
        %v1883 = vsel %vm484, %v1854, 0
        %v1886 = vsel %vm484, %v1855, 0
        %v1889 = vsel %vm484, %v1856, 0
        %v1892 = vsel %vm484, %v1857, 0
        %v1895 = vsel %vm484, %v1858, 0
        %v1898 = vsel %vm484, %v1859, 0
        %1900 = vmatprep.subr.mxu0 0.0
        %1901 = vmatpush1.xpose.msra.mxu0 0.0
        %1902 = vmatprep.subr.mxu0 0.0
        %1903 = vmatpush1.xpose.msra.mxu0 0.0
        %1904 = vmatprep.subr.mxu0 0.0
        %1905 = vmatpush1.xpose.msra.mxu0 0.0
        %1906 = vmatprep.subr.mxu0 0.0
        %1907 = vmatpush1.xpose.msra.mxu0 0.0
        %1908 = vmatprep.subr.mxu0 0.0
        %1909 = vmatpush1.xpose.msra.mxu0 0.0
        %1910 = vmatprep.subr.mxu0 0.0
        %1911 = vmatpush1.xpose.msra.mxu0 0.0
        %1912 = vmatprep.subr.mxu0 0.0
        %1913 = vmatpush1.xpose.msra.mxu0 0.0
        %1914 = vmatprep.subr.mxu0 0.0
        %1915 = vmatpush1.xpose.msra.mxu0 0.0
        %1916 = vmatprep.subr.mxu0 0.0
        %1917 = vmatpush1.xpose.msra.mxu0 %v1898
        %1918 = vmatprep.subr.mxu0 0.0
        %1919 = vmatpush1.xpose.msra.mxu0 %v1895
        %1920 = vmatprep.subr.mxu0 0.0
        %1921 = vmatpush1.xpose.msra.mxu0 %v1892
        %1922 = vmatprep.subr.mxu0 0.0
        %1923 = vmatpush1.xpose.msra.mxu0 %v1889
        %1924 = vmatprep.subr.mxu0 0.0
        %1925 = vmatpush1.xpose.msra.mxu0 %v1886
        %1926 = vmatprep.subr.mxu0 0.0
        %1927 = vmatpush1.xpose.msra.mxu0 %v1883
        %1928 = vmatprep.subr.mxu0 0.0
        %1929 = vmatpush1.xpose.msra.mxu0 %v1880
        %1930 = vmatprep.subr.mxu0 0.0
        %1931 = vmatpush1.xpose.msra.mxu0 %v1877
        %1932 = vmatprep.subr.mxu0 0.0
        %1933 = vmatpush2.xpose.msra.mxu0 0.0
        %1934 = vmatprep.subr.mxu0 0.0
        %1935 = vmatpush2.xpose.msra.mxu0 0.0
        %1936 = vmatprep.subr.mxu0 0.0
        %1937 = vmatpush2.xpose.msra.mxu0 0.0
        %1938 = vmatprep.subr.mxu0 0.0
        %1939 = vmatpush2.xpose.msra.mxu0 0.0
        %1940 = vmatprep.subr.mxu0 0.0
        %1941 = vmatpush2.xpose.msra.mxu0 0.0
        %1942 = vmatprep.subr.mxu0 0.0
        %1943 = vmatpush2.xpose.msra.mxu0 0.0
        %1944 = vmatprep.subr.mxu0 0.0
        %1945 = vmatpush2.xpose.msra.mxu0 0.0
        %1946 = vmatprep.subr.mxu0 0.0
        %1947 = vmatpush2.xpose.msra.mxu0 0.0
        %1948 = vmatprep.subr.mxu0 0.0
        %1949 = vmatpush2.xpose.msra.mxu0 0.0
        %1950 = vmatprep.subr.mxu0 0.0
        %1951 = vmatpush2.xpose.msra.mxu0 0.0
        %1952 = vmatprep.subr.mxu0 0.0
        %1953 = vmatpush2.xpose.msra.mxu0 0.0
        %1954 = vmatprep.subr.mxu0 0.0
        %1955 = vmatpush2.xpose.msra.mxu0 0.0
        %1956 = vmatprep.subr.mxu0 0.0
        %1957 = vmatpush2.xpose.msra.mxu0 0.0
        %1958 = vmatprep.subr.mxu0 0.0
        %1959 = vmatpush2.xpose.msra.mxu0 0.0
        %1960 = vmatprep.subr.mxu0 0.0
        %1961 = vmatpush2.xpose.msra.mxu0 0.0
        %1962 = vmatprep.subr.mxu0 0.0
        %1963 = vmatpush2.xpose.msra.mxu0 0.0
        %1964 = vmatprep.mubr.f32.mxu0 0.0
        %1965 = vmatmul.mubr.f32.gmra.mxu0 %v1865
        %v1966 = vpop.f32.mrf.mxu0
        %v1967 = vadd.f32 0.0, %v1966
        %v1968 = vpop.f32.mrf.mxu0
        %1969 = vmatprep.mubr.f32.mxu0 0.0
        %1970 = vmatmul.mubr.f32.gmra.mxu0 %v1868
        %v1971 = vpop.f32.mrf.mxu0
        %v1972 = vadd.f32 0.0, %v1971
        %v1973 = vpop.f32.mrf.mxu0
        %1974 = vmatprep.mubr.f32.mxu0 0.0
        %1975 = vmatmul.mubr.f32.gmra.mxu0 %v1871
        %v1976 = vpop.f32.mrf.mxu0
        %v1977 = vadd.f32 0.0, %v1976
        %v1978 = vpop.f32.mrf.mxu0
        %1979 = vmatprep.mubr.f32.mxu0 0.0
        %1980 = vmatmul.mubr.f32.gmra.mxu0 %v1874
        %v1981 = vpop.f32.mrf.mxu0
        %v1982 = vadd.f32 0.0, %v1981
        %v1983 = vpop.f32.mrf.mxu0
        %1984 = vdwg.mxu0
        %v1985 = vld [vmem:[%s8] sm:$0xff]
        %v1986 = vld [vmem:[%s8 + $0x8] sm:$0xff]
        %v1987 = vld [vmem:[%s8 + $0x10] sm:$0xff]
        %v1988 = vld [vmem:[%s8 + $0x18] sm:$0xff]
        %1990 = vset.pattern.permute.xlu0 0
        %1991 = vperm.xlu0 %1990, %v1985
        %v1992 = vpop.permute.xlu0 %1991
        %1995 = vset.pattern.permute.xlu0 0
        %1996 = vperm.xlu0 %1995, %v1986
        %v1997 = vpop.permute.xlu0 %1996
        %2000 = vset.pattern.permute.xlu0 0
        %2001 = vperm.xlu0 %2000, %v1987
        %v2002 = vpop.permute.xlu0 %2001
        %2005 = vset.pattern.permute.xlu0 0
        %2006 = vperm.xlu0 %2005, %v1988
        %v2007 = vpop.permute.xlu0 %2006
        %v2009 = vmul.f32 %v1967, %v1992
        %v2010 = vmul.f32 %v1972, %v1997
        %v2011 = vmul.f32 %v1977, %v2002
        %v2012 = vmul.f32 %v1982, %v2007
        %v2013 = vld [vmem:[%s9] sm:$0xff]
        %v2014 = vld [vmem:[%s9 + $0x8] sm:$0xff]
        %v2015 = vld [vmem:[%s9 + $0x10] sm:$0xff]
        %v2016 = vld [vmem:[%s9 + $0x18] sm:$0xff]
        %2018 = vset.pattern.permute.xlu0 0
        %2019 = vperm.xlu0 %2018, %v2013
        %v2020 = vpop.permute.xlu0 %2019
        %2023 = vset.pattern.permute.xlu0 0
        %2024 = vperm.xlu0 %2023, %v2014
        %v2025 = vpop.permute.xlu0 %2024
        %2028 = vset.pattern.permute.xlu0 0
        %2029 = vperm.xlu0 %2028, %v2015
        %v2030 = vpop.permute.xlu0 %2029
        %2033 = vset.pattern.permute.xlu0 0
        %2034 = vperm.xlu0 %2033, %v2016
        %v2035 = vpop.permute.xlu0 %2034
        %v2037 = vadd.f32 %v2009, %v2020
        %v2038 = vadd.f32 %v2010, %v2025
        %v2039 = vadd.f32 %v2011, %v2030
        %v2040 = vadd.f32 %v2012, %v2035
        %v2041 = vadd.f32 %v2037, %v358
        %v2042 = vadd.f32 %v2038, %v359
        %v2043 = vadd.f32 %v2039, %v360
        %v2044 = vadd.f32 %v2040, %v361
        %v2045 = vmax.f32 %v2041, 0.0
        %v2046 = vmax.f32 %v2042, 0.0
        %v2047 = vmax.f32 %v2043, 0.0
        %v2048 = vmax.f32 %v2044, 0.0
        %vm2049 = vcmask 523264
        %2050 = vst.msk [vmem:[%s352] sm:$0xff] %vm2049, %v2045
        %2051 = vst.msk [vmem:[%s352 + $0x8] sm:$0xff] %vm2049, %v2046
        %2052 = vst.msk [vmem:[%s352 + $0x10] sm:$0xff] %vm2049, %v2047
        %2053 = vst.msk [vmem:[%s352 + $0x18] sm:$0xff] %vm2049, %v2048
        %s2054 = sand.u32 %s247, 1
        %s2055 = scalar_lea.sflag [#allocation4], %s2054
        %s2056 = sand.u32 %s247, 1
        %s2057 = smul.addr %s2056, 32
        %s2058 = scalar_lea.vmem [#allocation3], %s2057
        // Predicated region
        $region61: #{tpu_custom_call.1} parent=59 // pred_check
          %p2059 = pneg %p257
        $region62: #{tpu_custom_call.1} parent=59 // pred_check_branch
          %2061 = sbr.rel (%p2059) target = $region64
        $region63: #{tpu_custom_call.1} parent=59 // pred_region
          %s2063 = ssub.s32 512, 512
          %2064 = vsyncadd %s2055, %s2063
          %s2065 = smul.addr %s24, 4
          %s2066 = smul.addr %s2065, 128
          %s2067 = scalar_lea.hbm %s10, %s2066
          %s2068 = sshll.u32 %s2058, 4
          %s2069 = int_to_ptr.vmem [resolvable:$true] %s2068
          %2074 = dma.vmem_to_hbm [thread:$0]  %s2069, 512, %s2067, %s2055, 128, 128, 8
        $region64: #{tpu_custom_call.1} parent=59 // pred_fallthru
          _
      $region60: #{tpu_custom_call.1} parent=5 // pred_fallthru
        _
      %p2075 = scmp.le.s32.totalorder 2, %s19
      // Predicated region
      $region65: #{tpu_custom_call.1} parent=5 // pred_check
        %p2076 = pneg %p2075
      $region66: #{tpu_custom_call.1} parent=5 // pred_check_branch
        %2078 = sbr.rel (%p2076) target = $region68
      $region67: #{tpu_custom_call.1} parent=5 // pred_region
        %s2079 = ssub.s32 %s19, 2
        // Predicated region
        $region69: #{tpu_custom_call.1} parent=67 // pred_check
          %p2080 = pneg %p263
        $region70: #{tpu_custom_call.1} parent=67 // pred_check_branch
          %2082 = sbr.rel (%p2080) target = $region72
        $region71: #{tpu_custom_call.1} parent=67 // pred_region
          %s2083 = sand.u32 %s248, 1
          %s2084 = scalar_lea.sflag [#allocation4], %s2083
          %s2085 = sand.u32 %s248, 1
          %s2086 = smul.addr %s2085, 32
          %s2087 = scalar_lea.vmem [#allocation3], %s2086
          %2088 = dma.done %s2084, 512
        $region72: #{tpu_custom_call.1} parent=67 // pred_fallthru
          _
      $region68: #{tpu_custom_call.1} parent=5 // pred_fallthru
        _
    $region6: #{tpu_custom_call.1} parent=1 // loop_footer
      %s23 = sadd.s32 1, %s19
    $region7: #{tpu_custom_call.1} parent=1 // loop_footer_branch
      %18 = sbr.rel target = $region3
    $region8: #{tpu_custom_call.1} parent=1 // loop_exit
      _
    %2089 = vsyncpa [#allocation4], 1
    %s2090 = scalar_lea.sflag [#allocation4], 1
    %2091 = vsyncpa %s2090, 1

</llo_original>
